<compile_context>
chip_gen: v7x
topology: tpu7x:2x2x1
jax: 0.10.0
libtpu: 0.0.40
codegen_flags: <defaults>
</compile_context>

<pallas_src>
from itertools import product

import numpy as np
import jax
import jax.numpy as jnp
from jax.experimental import pallas as pl
from jax.experimental.pallas import tpu as pltpu


# ----------------------------------------------------------------------------
# Deterministic parameter (projector) construction — mirrors the torch __init__
# (pandas df.eval replaced by an equivalent host-side numpy mask; init-time only)
# ----------------------------------------------------------------------------
def build_scale_rows(J: int):
    """Synthetic df_scale_input: one row per scattering-covariance coefficient.

    Each row is (coeff_type, jl1, jr1, j2); j2 = -1 is the sentinel for
    'skewness' coefficients (so the j2 masks below never match them).
    """
    rows = []
    # skewness coefficients: all (jl1, jr1) with jr1 <= jl1
    for jl1 in range(J):
        for jr1 in range(jl1 + 1):
            rows.append(("skewness", jl1, jr1, -1))
    # envelope (order-2) coefficients: all (jl1, jr1, j2) with jr1 <= jl1 < j2
    for j2 in range(1, J):
        for jl1 in range(j2):
            for jr1 in range(jl1 + 1):
                rows.append(("envelope", jl1, jr1, j2))
    return rows


def construct_invariant_projector(J: int, rows, skew_redundance: bool) -> np.ndarray:
    """Same logic as CorrelationScaleInvariant._construct_invariant_projector."""
    n = len(rows)
    P_l = []
    for a in range(1 - int(skew_redundance), J):
        P_row = np.zeros(n, dtype=np.float32)
        for j in range(a, J):
            mask = np.array(
                [(r[0] == "skewness" and r[1] == j and r[2] == j - a) for r in rows]
            )
            assert mask.sum() == 1
            P_row[mask] = 1.0
        P_l.append(P_row)
    for a, b in product(range(J - 1), range(-J + 1, 0)):
        if a - b >= J:
            continue
        P_row = np.zeros(n, dtype=np.float32)
        for j in range(a, J + b):
            mask = np.array(
                [(r[1] == j and r[2] == j - a and r[3] == j - b) for r in rows]
            )
            assert mask.sum() == 1
            P_row[mask] = 1.0
        P_l.append(P_row)
    P = np.stack(P_l)
    P = P / P.sum(-1, keepdims=True)
    return P.astype(np.complex64)


# ----------------------------------------------------------------------------
# Pallas kernel: one lane-dense matmul per group tile, natural layout
# ----------------------------------------------------------------------------
def _kron_proj_kernel(w_ref, c_ref, o_ref):
    # c : (TG, Nc*2K)  natural-layout cov slab, re/im interleaved on the lanes
    # w : (Nc*2K, R*2K) resident Kronecker weight  W = P^T ⊗ I_{2K}  (real)
    # o : (TG, R*2K)   final-layout output slab (interleaved complex result)
    o_ref[...] = jnp.dot(
        c_ref[...],
        w_ref[...],
        preferred_element_type=jnp.float32,
        precision=jax.lax.Precision.HIGHEST,
    )


def _choose_group_tile(G: int, f_in: int, f_out: int) -> int:
    """Group-tile (sublane-axis) size for the streamed (G,f_in)@(f_in,f_out) matmul.

    Padding-aware and VMEM-aware: double-buffered in/out slabs stay under a
    budget that fits v5e's 16 MiB default scoped VMEM (VMEM is a non-issue on
    v6e/v7x at these sizes), tiles are multiples of 8 (sublanes), per-call
    padding waste is at most ~8 rows per grid step, and the grid keeps >= 2
    steps when there is enough work (v7x shards the "parallel" axis over 2 TCs).
    """
    bytes_per_group = 4 * (f_in + f_out)
    budget = 6 << 20  # double-buffered streaming slabs
    tg_max = max(8, min(4096, (budget // (2 * bytes_per_group)) // 8 * 8))
    n_steps = max(2 if G > 8 else 1, pl.cdiv(G, tg_max))
    return pl.cdiv(pl.cdiv(G, n_steps), 8) * 8


@jax.jit
def _csi_kernel(P: jnp.ndarray, cov: jnp.ndarray) -> jnp.ndarray:
    """Pallas path. Assumes imag(P) == 0 (true for the module's constructor)."""
    B, Nl, Nc, K = cov.shape
    R = P.shape[0]
    G = B * Nl
    K2 = 2 * K
    F_in = Nc * K2
    F_out = R * K2

    pr = jnp.real(P).astype(jnp.float32)                       # (R, Nc)
    # Resident Kronecker weight: W[n*2K + m, r*2K + m'] = P[r, n] * delta(m, m')
    w = jnp.kron(pr.T, jnp.eye(K2, dtype=jnp.float32))         # (Nc*2K, R*2K)

    # Interleave re/im on the last axis (single fused producer pass; same data
    # layout as a complex64->float32 bitcast), then fold to the natural 2-D
    # streaming view (G, Nc*2K).  Only adjacent axes are merged -> free reshape.
    cov_f = jnp.stack(
        [jnp.real(cov).astype(jnp.float32), jnp.imag(cov).astype(jnp.float32)],
        axis=-1,
    ).reshape(G, F_in)

    TG = _choose_group_tile(G, F_in, F_out)
    G_pad = pl.cdiv(G, TG) * TG
    if G_pad != G:
        cov_f = jnp.pad(cov_f, ((0, G_pad - G), (0, 0)))        # fuses into producer

    grid = (G_pad // TG,)
    cost = pl.CostEstimate(
        flops=2 * G_pad * F_in * F_out,
        transcendentals=0,
        bytes_accessed=4 * (G_pad * (F_in + F_out) + F_in * F_out),
    )

    out_f = pl.pallas_call(
        _kron_proj_kernel,
        out_shape=jax.ShapeDtypeStruct((G_pad, F_out), jnp.float32),
        grid_spec=pltpu.PrefetchScalarGridSpec(
            num_scalar_prefetch=0,
            grid=grid,
            in_specs=[
                pl.BlockSpec((F_in, F_out), lambda g: (0, 0)),   # W (tiny, resident)
                pl.BlockSpec((TG, F_in), lambda g: (g, 0)),      # cov slab (contiguous)
            ],
            out_specs=pl.BlockSpec((TG, F_out), lambda g: (g, 0)),
        ),
        compiler_params=pltpu.CompilerParams(
            dimension_semantics=("parallel",),
        ),
        cost_estimate=cost,
    )(w, cov_f)

    # (G, R*2K) -> (B, Nl, R, K, 2) -> complex64; free reshape, fused recombine.
    out_f = out_f[:G].reshape(B, Nl, R, K, 2)
    return jax.lax.complex(out_f[..., 0], out_f[..., 1]).astype(jnp.complex64)


@jax.jit
def _csi_einsum(P: jnp.ndarray, cov: jnp.ndarray) -> jnp.ndarray:
    """Reference / fallback path (small problems, complex P, or very large K)."""
    return jnp.einsum(
        "rn,blnk->blrk", P, cov, precision=jax.lax.Precision.HIGHEST
    ).astype(jnp.complex64)


def _projector_is_real(P) -> bool:
    """True iff P has an exactly-zero imaginary part (host-side check)."""
    if not jnp.iscomplexobj(P):
        return True
    try:
        return bool(np.max(np.abs(np.asarray(jax.device_get(jnp.imag(P))))) == 0.0)
    except Exception:
        # P is a tracer (called under an outer jit): the module's constructor
        # always builds a real projector, so assume real.
        return True


def correlation_scale_invariant(P, cov, *, force_kernel: bool = False):
    """Forward pass of CorrelationScaleInvariant: out = P @ cov (contract Nc)."""
    B, Nl, Nc, K = cov.shape
    R, Nc_p = P.shape
    assert Nc_p == Nc, "projector / cov coefficient-count mismatch"

    f_in, f_out = Nc * 2 * K, R * 2 * K
    kron_bytes = 4 * f_in * f_out
    n_stream = B * Nl * Nc * K

    # Dispatch: Pallas only pays off once the streaming volume is large, the
    # Kronecker weight stays comfortably VMEM-resident / HBM-bound, and the
    # projector is purely real (the kernel drops imag(P)).
    use_kernel = force_kernel or (n_stream >= (1 << 16) and kron_bytes <= (2 << 20))
    if not _projector_is_real(P):
        # TODO(synk): kernel exploits imag(P) == 0 (always true for the module's
        # constructor); complex-valued projectors take the XLA einsum path.
        use_kernel = False
    if not use_kernel:
        return _csi_einsum(P, cov)
    return _csi_kernel(P, cov)


# ----------------------------------------------------------------------------
if __name__ == "__main__":
    J = 4                     # sc_idxer.JQ(1)
    skew_redundance = False
    rows = build_scale_rows(J)
    P_np = construct_invariant_projector(J, rows, skew_redundance)   # (R, Nc)
    P = jnp.asarray(P_np)
    R = P.shape[0]            # 9 for J=4
    Nc = len(rows)            # 20 for J=4

    B, Nl, K = 4, 12, 8       # G = B*Nl = 48 -> 2 parallel grid steps of 24 groups

    key = jax.random.PRNGKey(0)
    kr, ki = jax.random.split(key)
    cov = (jax.random.normal(kr, (B, Nl, Nc, K), dtype=jnp.float32)
           + 1j * jax.random.normal(ki, (B, Nl, Nc, K), dtype=jnp.float32)
           ).astype(jnp.complex64)

    # Pallas path (forced, since this demo problem is below the dispatch threshold).
    out = correlation_scale_invariant(P, cov, force_kernel=True)
    out = jax.block_until_ready(out)

    assert out.shape == (B, Nl, R, K)
    assert out.dtype == jnp.complex64

    # High-precision host reference of `P @ cov`.
    ref = np.einsum(
        "rn,blnk->blrk",
        np.asarray(P_np).astype(np.complex128),
        np.asarray(cov).astype(np.complex128),
    ).astype(np.complex64)
    np.testing.assert_allclose(np.asarray(out), ref, rtol=1e-5, atol=1e-5)

    # Default dispatch (small problem -> XLA einsum fallback) must agree too.
    out_default = jax.block_until_ready(correlation_scale_invariant(P, cov))
    np.testing.assert_allclose(np.asarray(out_default), ref, rtol=1e-5, atol=1e-5)

    print("KERNEL_OK")
</pallas_src>

<mosaic_0001>
module attributes {stable_mosaic.version = 11 : i64} {
  func.func @_kron_proj_kernel(%arg0: i32, %arg1: memref<320x144xf32, #tpu.memory_space<vmem>>, %arg2: memref<24x320xf32, #tpu.memory_space<vmem>>, %arg3: memref<24x144xf32, #tpu.memory_space<vmem>>) attributes {dimension_semantics = [#tpu.dimension_semantics<parallel>], iteration_bounds = array<i64: 2>, scalar_prefetch = 0 : i64, scratch_operands = 0 : i64, tpu.core_type = #tpu.core_type<tc>, window_params = [{pipeline_mode = #tpu.pipeline_mode<synchronous>, transform_indices = @transform_0, window_bounds = array<i64: 320, 144>}, {transform_indices = @transform_1, window_bounds = array<i64: 24, 320>}, {transform_indices = @transform_2, window_bounds = array<i64: 24, 144>}]} {
    %c0 = arith.constant 0 : index
    %c0_0 = arith.constant 0 : index
    %0 = vector.load %arg2[%c0, %c0_0] : memref<24x320xf32, #tpu.memory_space<vmem>>, vector<24x320xf32>
    %c0_1 = arith.constant 0 : index
    %c0_2 = arith.constant 0 : index
    %1 = vector.load %arg1[%c0_1, %c0_2] : memref<320x144xf32, #tpu.memory_space<vmem>>, vector<320x144xf32>
    %cst = arith.constant dense<0.000000e+00> : vector<24x144xf32>
    %2 = tpu.matmul %0, %1, %cst {dimension_numbers = #tpu.dot_dimension_numbers<[1], [0], [0], [1], [0, 0, 1, 1], [], []>, precision = #tpu.contract_precision<fp32>} : vector<24x320xf32>, vector<320x144xf32>, vector<24x144xf32> -> vector<24x144xf32>
    %c0_3 = arith.constant 0 : index
    %c0_4 = arith.constant 0 : index
    %3 = vector.load %arg3[%c0_3, %c0_4] : memref<24x144xf32, #tpu.memory_space<vmem>>, vector<24x144xf32>
    tpu.vector_store %arg3[%c0_3, %c0_4], %2 {strides = array<i32>} : memref<24x144xf32, #tpu.memory_space<vmem>>, vector<24x144xf32>,
    return
  }
  func.func @transform_0(%arg0: i32) -> (i32, i32) {
    %c0_i32 = arith.constant 0 : i32
    %c0_i32_0 = arith.constant 0 : i32
    %c0_i32_1 = arith.constant 0 : i32
    return %c0_i32, %c0_i32_0 : i32, i32
  }
  func.func @transform_1(%arg0: i32) -> (i32, i32) {
    %c0_i32 = arith.constant 0 : i32
    %c0_i32_0 = arith.constant 0 : i32
    return %arg0, %c0_i32 : i32, i32
  }
  func.func @transform_2(%arg0: i32) -> (i32, i32) {
    %c0_i32 = arith.constant 0 : i32
    %c0_i32_0 = arith.constant 0 : i32
    return %arg0, %c0_i32 : i32, i32
  }
}

</mosaic_0001>

<llo_original>
// kernel: custom-call
$region0: #{custom-call}
  %s0 = inlined_call_operand.hbm [shape: c64[9,20], index: 0, kind: input, shape index: {}]
  %s1 = inlined_call_operand.vmem [shape: f32[9,20], index: 1, kind: output, shape index: {}]
  $region1: #{custom-call} parent=0
    #allocation0 [shape = 's32[1]{0}', space=sflag, size = 0x4, scoped, tag = 'scoped memory for custom-call']
    %2 = vsyncpa [#allocation0], 0
    %s3 = sshll.u32 %s1, 4
    %s4 = int_to_ptr.vmem [resolvable:$true] %s3
    %6 = dma.hbm_to_vmem [thread:$0]  %s0, 256, %s4, [#allocation0]
    %7 = dma.done [#allocation0], 256
    %8 = vsyncpa [#allocation0], 1

// kernel: custom-call.2
$region0: #{custom-call.2}
  %s0 = inlined_call_operand.hbm [shape: c64[4,12,20,8], index: 0, kind: input, shape index: {}]
  %s1 = inlined_call_operand.vmem [shape: f32[4,12,20,8], index: 1, kind: output, shape index: {}]
  $region1: #{custom-call.2} parent=0
    #allocation0 [shape = 's32[1]{0}', space=sflag, size = 0x4, scoped, tag = 'scoped memory for custom-call.2']
    %2 = vsyncpa [#allocation0], 0
    %s3 = sshll.u32 %s1, 4
    %s4 = int_to_ptr.vmem [resolvable:$true] %s3
    %6 = dma.hbm_to_vmem [thread:$0]  %s0, 6144, %s4, [#allocation0]
    %7 = dma.done [#allocation0], 6144
    %8 = vsyncpa [#allocation0], 1

// kernel: custom-call.3
$region0: #{custom-call.3}
  %s0 = inlined_call_operand.hbm [shape: c64[4,12,20,8], index: 0, kind: input, shape index: {}]
  %s1 = inlined_call_operand.vmem [shape: f32[4,12,20,8], index: 1, kind: output, shape index: {}]
  %s2 = scalar_lea.hbm %s0, 6144
  $region1: #{custom-call.3} parent=0
    #allocation0 [shape = 's32[1]{0}', space=sflag, size = 0x4, scoped, tag = 'scoped memory for custom-call.3']
    %3 = vsyncpa [#allocation0], 0
    %s4 = sshll.u32 %s1, 4
    %s5 = int_to_ptr.vmem [resolvable:$true] %s4
    %7 = dma.hbm_to_vmem [thread:$0]  %s2, 6144, %s5, [#allocation0]
    %8 = dma.done [#allocation0], 6144
    %9 = vsyncpa [#allocation0], 1

// kernel: _csi_kernel.1
$region0: #{_csi_kernel.1}
  #allocation0 [shape = 'u32[]', space=smem, size = 0x4, offset = 0x4, fixed_abs, tag = 'smem constant byte address 0x4 - core index']
  #allocation1 [shape = 'u32[144,128]{1,0:T(1,128)}', space=vmem, size = 0x12000, scoped, tag = 'internal scratch']
  %s0 = inlined_call_operand.vmem [shape: f32[320,144], index: 0, kind: input, shape index: {}]
  %s1 = inlined_call_operand.vmem [shape: f32[48,320], index: 1, kind: input, shape index: {}]
  %s2 = inlined_call_operand.vmem [shape: f32[48,144], index: 2, kind: output, shape index: {}]
  %s3 = sld [smem:[#allocation0]]
  $region41: #{_csi_kernel.1} parent=0
    _
  %s5 = ssub.s32 1, %s3
  %s6 = scalar_select 0, %s5, %s3
  loop: start=0, step=1, limit=4
  $region2: #{_csi_kernel.1} parent=0 // loop_pre_header
    _
  $region3: #{_csi_kernel.1} parent=0 // loop_header
    %s8 = sphi 0, %s12
    %p9 = scmp.ge.s32.totalorder %s8, 4
    %s16 = sphi 0, %s16
    %s18 = sphi 0, %s16
    %s19 = sphi 0, %s18
    %s33 = sphi 0, %s19
    %s39 = sphi 0, %s41
    %s42 = sphi 0, %s39
    %s43 = sphi 0, %s42
    %s59 = sphi 0, %s43
    %s65 = sphi 0, %s67
    %s68 = sphi 0, %s65
    %s69 = sphi 0, %s68
    %s85 = sphi 0, %s69
  $region4: #{_csi_kernel.1} parent=0 // loop_header_branch
    %11 = sbr.rel (%p9) target = $region8
  $region5: #{_csi_kernel.1} parent=0 // loop_body
    %s13 = ssub.s32 %s8, 1
    %s14 = ssub.s32 %s8, 2
    %s15 = sadd.s32 %s8, 1
    %s17 = sadd.s32 %s16, 1
    %p20 = scmp.eq.s32.totalorder %s8, 1
    %p21 = scmp.ne.s32.totalorder %s16, %s18
    %p22 = scmp.eq.s32.totalorder %s8, 0
    %p23 = por %p21, %p22
    %p24 = scmp.ne.s32.totalorder %s16, %s18
    %p25 = scmp.eq.s32.totalorder %s13, 1
    %p26 = por %p24, %p25
    %p27 = scmp.ne.s32.totalorder %s18, %s19
    %p28 = scmp.eq.s32.totalorder %s13, 0
    %p29 = por %p27, %p28
    %p30 = scmp.ne.s32.totalorder %s18, %s19
    %p31 = scmp.eq.s32.totalorder %s14, 1
    %p32 = por %p30, %p31
    %p34 = scmp.ne.s32.totalorder %s19, %s33
    %p35 = scmp.eq.s32.totalorder %s14, 0
    %p36 = por %p34, %p35
    %s37 = ssub.s32 %s8, %s15
    %p38 = scmp.eq.s32.totalorder %s37, 0
    %s40 = sadd.s32 %s39, 1
    %s41 = scalar_select %p38, %s39, %s40
    %p44 = pneg %p38
    %p45 = scmp.eq.s32.totalorder %s8, 1
    %p46 = por %p44, %p45
    %p47 = scmp.ne.s32.totalorder %s39, %s42
    %p48 = scmp.eq.s32.totalorder %s8, 0
    %p49 = por %p47, %p48
    %p50 = scmp.ne.s32.totalorder %s39, %s42
    %p51 = scmp.eq.s32.totalorder %s13, 1
    %p52 = por %p50, %p51
    %p53 = scmp.ne.s32.totalorder %s42, %s43
    %p54 = scmp.eq.s32.totalorder %s13, 0
    %p55 = por %p53, %p54
    %p56 = scmp.ne.s32.totalorder %s42, %s43
    %p57 = scmp.eq.s32.totalorder %s14, 1
    %p58 = por %p56, %p57
    %p60 = scmp.ne.s32.totalorder %s43, %s59
    %p61 = scmp.eq.s32.totalorder %s14, 0
    %p62 = por %p60, %p61
    %s63 = ssub.s32 %s8, %s15
    %p64 = scmp.eq.s32.totalorder %s63, 0
    %s66 = sadd.s32 %s65, 1
    %s67 = scalar_select %p64, %s65, %s66
    %p70 = pneg %p64
    %p71 = scmp.eq.s32.totalorder %s8, 1
    %p72 = por %p70, %p71
    %p73 = scmp.ne.s32.totalorder %s65, %s68
    %p74 = scmp.eq.s32.totalorder %s8, 0
    %p75 = por %p73, %p74
    %p76 = scmp.ne.s32.totalorder %s65, %s68
    %p77 = scmp.eq.s32.totalorder %s13, 1
    %p78 = por %p76, %p77
    %p79 = scmp.ne.s32.totalorder %s68, %s69
    %p80 = scmp.eq.s32.totalorder %s13, 0
    %p81 = por %p79, %p80
    %p82 = scmp.ne.s32.totalorder %s68, %s69
    %p83 = scmp.eq.s32.totalorder %s14, 1
    %p84 = por %p82, %p83
    %p86 = scmp.ne.s32.totalorder %s69, %s85
    %p87 = scmp.eq.s32.totalorder %s14, 0
    %p88 = por %p86, %p87
    %p89 = scmp.le.s32.totalorder 1, %s8
    %p90 = scmp.lt.s32.totalorder %s8, 3
    %p91 = pnand %p89, %p90
    %p92 = pneg %p91
    // Predicated region
    $region9: #{_csi_kernel.1} parent=5 // pred_check
      _
    $region10: #{_csi_kernel.1} parent=5 // pred_check_branch
      %94 = sbr.rel (%p91) target = $region12
    $region11: #{_csi_kernel.1} parent=5 // pred_region
      %s95 = ssub.s32 %s8, 1
      // Predicated region
      $region13: #{_csi_kernel.1} parent=11 // pred_check
        %p96 = pneg %p29
      $region14: #{_csi_kernel.1} parent=11 // pred_check_branch
        %98 = sbr.rel (%p96) target = $region16
      $region15: #{_csi_kernel.1} parent=11 // pred_region
        _
      $region16: #{_csi_kernel.1} parent=11 // pred_fallthru
        _
    $region12: #{_csi_kernel.1} parent=5 // pred_fallthru
      _
    %p99 = scmp.lt.s32.totalorder %s8, 2
    // Predicated region
    $region17: #{_csi_kernel.1} parent=5 // pred_check
      %p100 = pneg %p99
    $region18: #{_csi_kernel.1} parent=5 // pred_check_branch
      %102 = sbr.rel (%p100) target = $region20
    $region19: #{_csi_kernel.1} parent=5 // pred_region
      // Predicated region
      $region21: #{_csi_kernel.1} parent=19 // pred_check
        %p103 = pneg %p49
      $region22: #{_csi_kernel.1} parent=19 // pred_check_branch
        %105 = sbr.rel (%p103) target = $region24
      $region23: #{_csi_kernel.1} parent=19 // pred_region
        %s106 = smul.u32 3, %s8
        %p107 = scmp.lt.s32.totalorder %s106, 5
        %s108 = scalar_select %p107, %s106, 5
        %s109 = smul.addr %s108, 3
        %s110 = smul.addr %s109, 8
        %s111 = scalar_lea.vmem %s1, %s110
        %s112 = smul.u32 3, %s8
      $region24: #{_csi_kernel.1} parent=19 // pred_fallthru
        _
    $region20: #{_csi_kernel.1} parent=5 // pred_fallthru
      _
    %p113 = scmp.le.s32.totalorder 1, %s8
    %p114 = scmp.lt.s32.totalorder %s8, 3
    %p115 = pnand %p113, %p114
    %p116 = pneg %p115
    // Predicated region
    $region25: #{_csi_kernel.1} parent=5 // pred_check
      _
    $region26: #{_csi_kernel.1} parent=5 // pred_check_branch
      %118 = sbr.rel (%p115) target = $region28
    $region27: #{_csi_kernel.1} parent=5 // pred_region
      %s119 = ssub.s32 %s8, 1
      %p120 = pneg %p29
      %p121 = pneg %p26
      %s122 = smul.u32 3, %s13
      %p123 = scmp.lt.s32.totalorder %s122, 5
      %s124 = scalar_select %p123, %s122, 5
      %s125 = smul.addr %s124, 3
      %s126 = smul.addr %s125, 8
      %s127 = scalar_lea.vmem %s1, %s126
      %p128 = pneg %p55
      %p129 = pneg %p52
      %p130 = pneg %p81
      %p131 = pneg %p78
      %s132 = smul.u32 3, %s13
      %p133 = scmp.lt.s32.totalorder %s132, 5
      %s134 = scalar_select %p133, %s132, 5
      %s135 = smul.addr %s134, 2
      %s136 = smul.addr %s135, 8
      %s137 = scalar_lea.vmem %s2, %s136
      %s138 = smul.u32 3, %s13
      %p139 = scmp.lt.s32.totalorder %s138, 5
      %s140 = scalar_select %p139, %s138, 5
      %s141 = smul.addr %s140, 3
      %s142 = smul.addr %s141, 8
      %s143 = scalar_lea.vmem %s1, %s142
      %s144 = smul.u32 3, %s13
      %s145 = smul.u32 3, %s13
      %p146 = scmp.lt.s32.totalorder %s145, 5
      %s147 = scalar_select %p146, %s145, 5
      %s148 = smul.addr %s147, 2
      %s149 = smul.addr %s148, 8
      %s150 = scalar_lea.vmem %s2, %s149
      %s151 = smul.u32 3, %s13
      %v152 = vld [vmem:[%s143] sm:$0xff]
      %v153 = vld [vmem:[%s143 + $0x8] sm:$0xff]
      %v154 = vld [vmem:[%s143 + $0x10] sm:$0xff]
      %v155 = vld [vmem:[%s143 + $0x18] sm:$0xff]
      %v156 = vld [vmem:[%s143 + $0x20] sm:$0xff]
      %v157 = vld [vmem:[%s143 + $0x28] sm:$0xff]
      %v158 = vld [vmem:[%s143 + $0x30] sm:$0xff]
      %v159 = vld [vmem:[%s143 + $0x38] sm:$0xff]
      %v160 = vld [vmem:[%s143 + $0x40] sm:$0xff]
      %v161 = vld [vmem:[%s0] sm:$0xff]
      %v162 = vld [vmem:[%s0 + $0x8] sm:$0xff]
      %v163 = vld [vmem:[%s0 + $0x10] sm:$0xff]
      %v164 = vld [vmem:[%s0 + $0x18] sm:$0xff]
      %v165 = vld [vmem:[%s0 + $0x20] sm:$0xff]
      %v166 = vld [vmem:[%s0 + $0x28] sm:$0xff]
      %v167 = vld [vmem:[%s0 + $0x30] sm:$0xff]
      %v168 = vld [vmem:[%s0 + $0x38] sm:$0xff]
      %v169 = vld [vmem:[%s0 + $0x40] sm:$0xff]
      %v170 = vld [vmem:[%s0 + $0x48] sm:$0xff]
      %v171 = vld [vmem:[%s0 + $0x50] sm:$0xff]
      %v172 = vld [vmem:[%s0 + $0x58] sm:$0xff]
      %v173 = vld [vmem:[%s0 + $0x60] sm:$0xff]
      %v174 = vld [vmem:[%s0 + $0x68] sm:$0xff]
      %v175 = vld [vmem:[%s0 + $0x70] sm:$0xff]
      %v176 = vld [vmem:[%s0 + $0x78] sm:$0xff]
      %v177 = vld [vmem:[%s0 + $0x80] sm:$0xff]
      %v178 = vld [vmem:[%s0 + $0x88] sm:$0xff]
      %v179 = vld [vmem:[%s0 + $0x90] sm:$0xff]
      %v180 = vld [vmem:[%s0 + $0x98] sm:$0xff]
      %v181 = vld [vmem:[%s0 + $0xa0] sm:$0xff]
      %v182 = vld [vmem:[%s0 + $0xa8] sm:$0xff]
      %v183 = vld [vmem:[%s0 + $0xb0] sm:$0xff]
      %v184 = vld [vmem:[%s0 + $0xb8] sm:$0xff]
      %v185 = vld [vmem:[%s0 + $0xc0] sm:$0xff]
      %v186 = vld [vmem:[%s0 + $0xc8] sm:$0xff]
      %v187 = vld [vmem:[%s0 + $0xd0] sm:$0xff]
      %v188 = vld [vmem:[%s0 + $0xd8] sm:$0xff]
      %v189 = vld [vmem:[%s0 + $0xe0] sm:$0xff]
      %v190 = vld [vmem:[%s0 + $0xe8] sm:$0xff]
      %v191 = vld [vmem:[%s0 + $0xf0] sm:$0xff]
      %v192 = vld [vmem:[%s0 + $0xf8] sm:$0xff]
      %v193 = vld [vmem:[%s0 + $0x100] sm:$0xff]
      %v194 = vld [vmem:[%s0 + $0x108] sm:$0xff]
      %v195 = vld [vmem:[%s0 + $0x110] sm:$0xff]
      %v196 = vld [vmem:[%s0 + $0x118] sm:$0xff]
      %v197 = vld [vmem:[%s0 + $0x120] sm:$0xff]
      %v198 = vld [vmem:[%s0 + $0x128] sm:$0xff]
      %v199 = vld [vmem:[%s0 + $0x130] sm:$0xff]
      %v200 = vld [vmem:[%s0 + $0x138] sm:$0xff]
      %v201 = vld [vmem:[%s0 + $0x140] sm:$0xff]
      %v202 = vld [vmem:[%s0 + $0x148] sm:$0xff]
      %v203 = vld [vmem:[%s0 + $0x150] sm:$0xff]
      %v204 = vld [vmem:[%s0 + $0x158] sm:$0xff]
      %v205 = vld [vmem:[%s0 + $0x160] sm:$0xff]
      %v206 = vld [vmem:[%s0 + $0x168] sm:$0xff]
      %v207 = vld [vmem:[%s0 + $0x170] sm:$0xff]
      %v208 = vld [vmem:[%s0 + $0x178] sm:$0xff]
      %v209 = vld [vmem:[%s0 + $0x180] sm:$0xff]
      %v210 = vld [vmem:[%s0 + $0x188] sm:$0xff]
      %v211 = vld [vmem:[%s0 + $0x190] sm:$0xff]
      %v212 = vld [vmem:[%s0 + $0x198] sm:$0xff]
      %v213 = vld [vmem:[%s0 + $0x1a0] sm:$0xff]
      %v214 = vld [vmem:[%s0 + $0x1a8] sm:$0xff]
      %v215 = vld [vmem:[%s0 + $0x1b0] sm:$0xff]
      %v216 = vld [vmem:[%s0 + $0x1b8] sm:$0xff]
      %v217 = vld [vmem:[%s0 + $0x1c0] sm:$0xff]
      %v218 = vld [vmem:[%s0 + $0x1c8] sm:$0xff]
      %v219 = vld [vmem:[%s0 + $0x1d0] sm:$0xff]
      %v220 = vld [vmem:[%s0 + $0x1d8] sm:$0xff]
      %v221 = vld [vmem:[%s0 + $0x1e0] sm:$0xff]
      %v222 = vld [vmem:[%s0 + $0x1e8] sm:$0xff]
      %v223 = vld [vmem:[%s0 + $0x1f0] sm:$0xff]
      %v224 = vld [vmem:[%s0 + $0x1f8] sm:$0xff]
      %v225 = vld [vmem:[%s0 + $0x200] sm:$0xff]
      %v226 = vld [vmem:[%s0 + $0x208] sm:$0xff]
      %v227 = vld [vmem:[%s0 + $0x210] sm:$0xff]
      %v228 = vld [vmem:[%s0 + $0x218] sm:$0xff]
      %v229 = vld [vmem:[%s0 + $0x220] sm:$0xff]
      %v230 = vld [vmem:[%s0 + $0x228] sm:$0xff]
      %v231 = vld [vmem:[%s0 + $0x230] sm:$0xff]
      %v232 = vld [vmem:[%s0 + $0x238] sm:$0xff]
      %v233 = vld [vmem:[%s0 + $0x240] sm:$0xff]
      %v234 = vld [vmem:[%s0 + $0x248] sm:$0xff]
      %v235 = vld [vmem:[%s0 + $0x250] sm:$0xff]
      %v236 = vld [vmem:[%s0 + $0x258] sm:$0xff]
      %v237 = vld [vmem:[%s0 + $0x260] sm:$0xff]
      %v238 = vld [vmem:[%s0 + $0x268] sm:$0xff]
      %v239 = vld [vmem:[%s0 + $0x270] sm:$0xff]
      %v240 = vld [vmem:[%s0 + $0x278] sm:$0xff]
      %vm241 = vcmask 523264
      %v243 = vsel %vm241, %v154, 0
      %v246 = vsel %vm241, %v157, 0
      %v249 = vsel %vm241, %v160, 0
      %v251 = vand.u32 %v162, 4294901760
      %252 = vmatprep.subr.mxu0 %v251
      %v253 = vand.u32 %v161, 4294901760
      %254 = vmatpush1.msra.mxu0 %v253
      %v255 = vand.u32 %v164, 4294901760
      %256 = vmatprep.subr.mxu0 %v255
      %v257 = vand.u32 %v163, 4294901760
      %258 = vmatpush1.msra.mxu0 %v257
      %v259 = vand.u32 %v166, 4294901760
      %260 = vmatprep.subr.mxu0 %v259
      %v261 = vand.u32 %v165, 4294901760
      %262 = vmatpush1.msra.mxu0 %v261
      %v263 = vand.u32 %v168, 4294901760
      %264 = vmatprep.subr.mxu0 %v263
      %v265 = vand.u32 %v167, 4294901760
      %266 = vmatpush1.msra.mxu0 %v265
      %v267 = vand.u32 %v170, 4294901760
      %268 = vmatprep.subr.mxu0 %v267
      %v269 = vand.u32 %v169, 4294901760
      %270 = vmatpush1.msra.mxu0 %v269
      %v271 = vand.u32 %v172, 4294901760
      %272 = vmatprep.subr.mxu0 %v271
      %v273 = vand.u32 %v171, 4294901760
      %274 = vmatpush1.msra.mxu0 %v273
      %v275 = vand.u32 %v174, 4294901760
      %276 = vmatprep.subr.mxu0 %v275
      %v277 = vand.u32 %v173, 4294901760
      %278 = vmatpush1.msra.mxu0 %v277
      %v279 = vand.u32 %v176, 4294901760
      %280 = vmatprep.subr.mxu0 %v279
      %v281 = vand.u32 %v175, 4294901760
      %282 = vmatpush1.msra.mxu0 %v281
      %v283 = vand.u32 %v178, 4294901760
      %284 = vmatprep.subr.mxu0 %v283
      %v285 = vand.u32 %v177, 4294901760
      %286 = vmatpush1.msra.mxu0 %v285
      %v287 = vand.u32 %v180, 4294901760
      %288 = vmatprep.subr.mxu0 %v287
      %v289 = vand.u32 %v179, 4294901760
      %290 = vmatpush1.msra.mxu0 %v289
      %v291 = vand.u32 %v182, 4294901760
      %292 = vmatprep.subr.mxu0 %v291
      %v293 = vand.u32 %v181, 4294901760
      %294 = vmatpush1.msra.mxu0 %v293
      %v295 = vand.u32 %v184, 4294901760
      %296 = vmatprep.subr.mxu0 %v295
      %v297 = vand.u32 %v183, 4294901760
      %298 = vmatpush1.msra.mxu0 %v297
      %v299 = vand.u32 %v186, 4294901760
      %300 = vmatprep.subr.mxu0 %v299
      %v301 = vand.u32 %v185, 4294901760
      %302 = vmatpush1.msra.mxu0 %v301
      %v303 = vand.u32 %v188, 4294901760
      %304 = vmatprep.subr.mxu0 %v303
      %v305 = vand.u32 %v187, 4294901760
      %306 = vmatpush1.msra.mxu0 %v305
      %v307 = vand.u32 %v190, 4294901760
      %308 = vmatprep.subr.mxu0 %v307
      %v309 = vand.u32 %v189, 4294901760
      %310 = vmatpush1.msra.mxu0 %v309
      %v311 = vand.u32 %v192, 4294901760
      %312 = vmatprep.subr.mxu0 %v311
      %v313 = vand.u32 %v191, 4294901760
      %314 = vmatpush1.msra.mxu0 %v313
      %v315 = vand.u32 %v194, 4294901760
      %316 = vmatprep.subr.mxu0 %v315
      %v317 = vand.u32 %v193, 4294901760
      %318 = vmatpush1.msra.mxu0 %v317
      %v319 = vand.u32 %v196, 4294901760
      %320 = vmatprep.subr.mxu0 %v319
      %v321 = vand.u32 %v195, 4294901760
      %322 = vmatpush1.msra.mxu0 %v321
      %v323 = vand.u32 %v198, 4294901760
      %324 = vmatprep.subr.mxu0 %v323
      %v325 = vand.u32 %v197, 4294901760
      %326 = vmatpush1.msra.mxu0 %v325
      %v327 = vand.u32 %v200, 4294901760
      %328 = vmatprep.subr.mxu0 %v327
      %v329 = vand.u32 %v199, 4294901760
      %330 = vmatpush1.msra.mxu0 %v329
      %v331 = vand.u32 %v202, 4294901760
      %332 = vmatprep.subr.mxu0 %v331
      %v333 = vand.u32 %v201, 4294901760
      %334 = vmatpush1.msra.mxu0 %v333
      %v335 = vand.u32 %v204, 4294901760
      %336 = vmatprep.subr.mxu0 %v335
      %v337 = vand.u32 %v203, 4294901760
      %338 = vmatpush1.msra.mxu0 %v337
      %v339 = vand.u32 %v206, 4294901760
      %340 = vmatprep.subr.mxu0 %v339
      %v341 = vand.u32 %v205, 4294901760
      %342 = vmatpush1.msra.mxu0 %v341
      %v343 = vand.u32 %v208, 4294901760
      %344 = vmatprep.subr.mxu0 %v343
      %v345 = vand.u32 %v207, 4294901760
      %346 = vmatpush1.msra.mxu0 %v345
      %v347 = vand.u32 %v210, 4294901760
      %348 = vmatprep.subr.mxu0 %v347
      %v349 = vand.u32 %v209, 4294901760
      %350 = vmatpush1.msra.mxu0 %v349
      %v351 = vand.u32 %v212, 4294901760
      %352 = vmatprep.subr.mxu0 %v351
      %v353 = vand.u32 %v211, 4294901760
      %354 = vmatpush1.msra.mxu0 %v353
      %v355 = vand.u32 %v214, 4294901760
      %356 = vmatprep.subr.mxu0 %v355
      %v357 = vand.u32 %v213, 4294901760
      %358 = vmatpush1.msra.mxu0 %v357
      %v359 = vand.u32 %v216, 4294901760
      %360 = vmatprep.subr.mxu0 %v359
      %v361 = vand.u32 %v215, 4294901760
      %362 = vmatpush1.msra.mxu0 %v361
      %v363 = vand.u32 %v218, 4294901760
      %364 = vmatprep.subr.mxu0 %v363
      %v365 = vand.u32 %v217, 4294901760
      %366 = vmatpush1.msra.mxu0 %v365
      %v367 = vand.u32 %v220, 4294901760
      %368 = vmatprep.subr.mxu0 %v367
      %v369 = vand.u32 %v219, 4294901760
      %370 = vmatpush1.msra.mxu0 %v369
      %v371 = vand.u32 %v222, 4294901760
      %372 = vmatprep.subr.mxu0 %v371
      %v373 = vand.u32 %v221, 4294901760
      %374 = vmatpush1.msra.mxu0 %v373
      %v375 = vand.u32 %v224, 4294901760
      %376 = vmatprep.subr.mxu0 %v375
      %v377 = vand.u32 %v223, 4294901760
      %378 = vmatpush1.msra.mxu0 %v377
      %v379 = vand.u32 %v153, 4294901760
      %v380 = vsub.f32 %v153, %v379
      %v381 = vand.u32 %v380, 4294901760
      %v382 = vsub.f32 %v380, %v381
      %v383 = vand.u32 %v382, 4294901760
      %384 = vmatprep.mubr.f32.mxu0 %v383
      %v385 = vand.u32 %v152, 4294901760
      %v386 = vsub.f32 %v152, %v385
      %v387 = vand.u32 %v386, 4294901760
      %v388 = vsub.f32 %v386, %v387
      %v389 = vand.u32 %v388, 4294901760
      %390 = vmatmul.mubr.f32.gmra.mrb[0].mxu0 %v389
      %v391 = vpop.f32.mrb[0].mxu0
      %v392 = vadd.f32 0.0, %v391
      %v393 = vpop.f32.mrb[0].mxu0
      %v394 = vadd.f32 0.0, %v393
      %v395 = vand.u32 %v156, 4294901760
      %v396 = vsub.f32 %v156, %v395
      %v397 = vand.u32 %v396, 4294901760
      %v398 = vsub.f32 %v396, %v397
      %v399 = vand.u32 %v398, 4294901760
      %400 = vmatprep.mubr.f32.mxu0 %v399
      %v401 = vand.u32 %v155, 4294901760
      %v402 = vsub.f32 %v155, %v401
      %v403 = vand.u32 %v402, 4294901760
      %v404 = vsub.f32 %v402, %v403
      %v405 = vand.u32 %v404, 4294901760
      %406 = vmatmul.mubr.f32.gmra.mrb[0].mxu0 %v405
      %v407 = vpop.f32.mrb[0].mxu0
      %v408 = vadd.f32 0.0, %v407
      %v409 = vpop.f32.mrb[0].mxu0
      %v410 = vadd.f32 0.0, %v409
      %v411 = vand.u32 %v159, 4294901760
      %v412 = vsub.f32 %v159, %v411
      %v413 = vand.u32 %v412, 4294901760
      %v414 = vsub.f32 %v412, %v413
      %v415 = vand.u32 %v414, 4294901760
      %416 = vmatprep.mubr.f32.mxu0 %v415
      %v417 = vand.u32 %v158, 4294901760
      %v418 = vsub.f32 %v158, %v417
      %v419 = vand.u32 %v418, 4294901760
      %v420 = vsub.f32 %v418, %v419
      %v421 = vand.u32 %v420, 4294901760
      %422 = vmatmul.mubr.f32.gmra.mrb[0].mxu0 %v421
      %v423 = vpop.f32.mrb[0].mxu0
      %v424 = vadd.f32 0.0, %v423
      %v425 = vpop.f32.mrb[0].mxu0
      %v426 = vadd.f32 0.0, %v425
      %427 = vdwg.mxu0
      %v428 = vand.u32 %v162, 4294901760
      %v429 = vsub.f32 %v162, %v428
      %v430 = vand.u32 %v429, 4294901760
      %v431 = vsub.f32 %v429, %v430
      %v432 = vand.u32 %v431, 4294901760
      %433 = vmatprep.subr.mxu0 %v432
      %v434 = vand.u32 %v161, 4294901760
      %v435 = vsub.f32 %v161, %v434
      %v436 = vand.u32 %v435, 4294901760
      %v437 = vsub.f32 %v435, %v436
      %v438 = vand.u32 %v437, 4294901760
      %439 = vmatpush1.msra.mxu0 %v438
      %v440 = vand.u32 %v164, 4294901760
      %v441 = vsub.f32 %v164, %v440
      %v442 = vand.u32 %v441, 4294901760
      %v443 = vsub.f32 %v441, %v442
      %v444 = vand.u32 %v443, 4294901760
      %445 = vmatprep.subr.mxu0 %v444
      %v446 = vand.u32 %v163, 4294901760
      %v447 = vsub.f32 %v163, %v446
      %v448 = vand.u32 %v447, 4294901760
      %v449 = vsub.f32 %v447, %v448
      %v450 = vand.u32 %v449, 4294901760
      %451 = vmatpush1.msra.mxu0 %v450
      %v452 = vand.u32 %v166, 4294901760
      %v453 = vsub.f32 %v166, %v452
      %v454 = vand.u32 %v453, 4294901760
      %v455 = vsub.f32 %v453, %v454
      %v456 = vand.u32 %v455, 4294901760
      %457 = vmatprep.subr.mxu0 %v456
      %v458 = vand.u32 %v165, 4294901760
      %v459 = vsub.f32 %v165, %v458
      %v460 = vand.u32 %v459, 4294901760
      %v461 = vsub.f32 %v459, %v460
      %v462 = vand.u32 %v461, 4294901760
      %463 = vmatpush1.msra.mxu0 %v462
      %v464 = vand.u32 %v168, 4294901760
      %v465 = vsub.f32 %v168, %v464
      %v466 = vand.u32 %v465, 4294901760
      %v467 = vsub.f32 %v465, %v466
      %v468 = vand.u32 %v467, 4294901760
      %469 = vmatprep.subr.mxu0 %v468
      %v470 = vand.u32 %v167, 4294901760
      %v471 = vsub.f32 %v167, %v470
      %v472 = vand.u32 %v471, 4294901760
      %v473 = vsub.f32 %v471, %v472
      %v474 = vand.u32 %v473, 4294901760
      %475 = vmatpush1.msra.mxu0 %v474
      %v476 = vand.u32 %v170, 4294901760
      %v477 = vsub.f32 %v170, %v476
      %v478 = vand.u32 %v477, 4294901760
      %v479 = vsub.f32 %v477, %v478
      %v480 = vand.u32 %v479, 4294901760
      %481 = vmatprep.subr.mxu0 %v480
      %v482 = vand.u32 %v169, 4294901760
      %v483 = vsub.f32 %v169, %v482
      %v484 = vand.u32 %v483, 4294901760
      %v485 = vsub.f32 %v483, %v484
      %v486 = vand.u32 %v485, 4294901760
      %487 = vmatpush1.msra.mxu0 %v486
      %v488 = vand.u32 %v172, 4294901760
      %v489 = vsub.f32 %v172, %v488
      %v490 = vand.u32 %v489, 4294901760
      %v491 = vsub.f32 %v489, %v490
      %v492 = vand.u32 %v491, 4294901760
      %493 = vmatprep.subr.mxu0 %v492
      %v494 = vand.u32 %v171, 4294901760
      %v495 = vsub.f32 %v171, %v494
      %v496 = vand.u32 %v495, 4294901760
      %v497 = vsub.f32 %v495, %v496
      %v498 = vand.u32 %v497, 4294901760
      %499 = vmatpush1.msra.mxu0 %v498
      %v500 = vand.u32 %v174, 4294901760
      %v501 = vsub.f32 %v174, %v500
      %v502 = vand.u32 %v501, 4294901760
      %v503 = vsub.f32 %v501, %v502
      %v504 = vand.u32 %v503, 4294901760
      %505 = vmatprep.subr.mxu0 %v504
      %v506 = vand.u32 %v173, 4294901760
      %v507 = vsub.f32 %v173, %v506
      %v508 = vand.u32 %v507, 4294901760
      %v509 = vsub.f32 %v507, %v508
      %v510 = vand.u32 %v509, 4294901760
      %511 = vmatpush1.msra.mxu0 %v510
      %v512 = vand.u32 %v176, 4294901760
      %v513 = vsub.f32 %v176, %v512
      %v514 = vand.u32 %v513, 4294901760
      %v515 = vsub.f32 %v513, %v514
      %v516 = vand.u32 %v515, 4294901760
      %517 = vmatprep.subr.mxu0 %v516
      %v518 = vand.u32 %v175, 4294901760
      %v519 = vsub.f32 %v175, %v518
      %v520 = vand.u32 %v519, 4294901760
      %v521 = vsub.f32 %v519, %v520
      %v522 = vand.u32 %v521, 4294901760
      %523 = vmatpush1.msra.mxu0 %v522
      %v524 = vand.u32 %v178, 4294901760
      %v525 = vsub.f32 %v178, %v524
      %v526 = vand.u32 %v525, 4294901760
      %v527 = vsub.f32 %v525, %v526
      %v528 = vand.u32 %v527, 4294901760
      %529 = vmatprep.subr.mxu0 %v528
      %v530 = vand.u32 %v177, 4294901760
      %v531 = vsub.f32 %v177, %v530
      %v532 = vand.u32 %v531, 4294901760
      %v533 = vsub.f32 %v531, %v532
      %v534 = vand.u32 %v533, 4294901760
      %535 = vmatpush1.msra.mxu0 %v534
      %v536 = vand.u32 %v180, 4294901760
      %v537 = vsub.f32 %v180, %v536
      %v538 = vand.u32 %v537, 4294901760
      %v539 = vsub.f32 %v537, %v538
      %v540 = vand.u32 %v539, 4294901760
      %541 = vmatprep.subr.mxu0 %v540
      %v542 = vand.u32 %v179, 4294901760
      %v543 = vsub.f32 %v179, %v542
      %v544 = vand.u32 %v543, 4294901760
      %v545 = vsub.f32 %v543, %v544
      %v546 = vand.u32 %v545, 4294901760
      %547 = vmatpush1.msra.mxu0 %v546
      %v548 = vand.u32 %v182, 4294901760
      %v549 = vsub.f32 %v182, %v548
      %v550 = vand.u32 %v549, 4294901760
      %v551 = vsub.f32 %v549, %v550
      %v552 = vand.u32 %v551, 4294901760
      %553 = vmatprep.subr.mxu0 %v552
      %v554 = vand.u32 %v181, 4294901760
      %v555 = vsub.f32 %v181, %v554
      %v556 = vand.u32 %v555, 4294901760
      %v557 = vsub.f32 %v555, %v556
      %v558 = vand.u32 %v557, 4294901760
      %559 = vmatpush1.msra.mxu0 %v558
      %v560 = vand.u32 %v184, 4294901760
      %v561 = vsub.f32 %v184, %v560
      %v562 = vand.u32 %v561, 4294901760
      %v563 = vsub.f32 %v561, %v562
      %v564 = vand.u32 %v563, 4294901760
      %565 = vmatprep.subr.mxu0 %v564
      %v566 = vand.u32 %v183, 4294901760
      %v567 = vsub.f32 %v183, %v566
      %v568 = vand.u32 %v567, 4294901760
      %v569 = vsub.f32 %v567, %v568
      %v570 = vand.u32 %v569, 4294901760
      %571 = vmatpush1.msra.mxu0 %v570
      %v572 = vand.u32 %v186, 4294901760
      %v573 = vsub.f32 %v186, %v572
      %v574 = vand.u32 %v573, 4294901760
      %v575 = vsub.f32 %v573, %v574
      %v576 = vand.u32 %v575, 4294901760
      %577 = vmatprep.subr.mxu0 %v576
      %v578 = vand.u32 %v185, 4294901760
      %v579 = vsub.f32 %v185, %v578
      %v580 = vand.u32 %v579, 4294901760
      %v581 = vsub.f32 %v579, %v580
      %v582 = vand.u32 %v581, 4294901760
      %583 = vmatpush1.msra.mxu0 %v582
      %v584 = vand.u32 %v188, 4294901760
      %v585 = vsub.f32 %v188, %v584
      %v586 = vand.u32 %v585, 4294901760
      %v587 = vsub.f32 %v585, %v586
      %v588 = vand.u32 %v587, 4294901760
      %589 = vmatprep.subr.mxu0 %v588
      %v590 = vand.u32 %v187, 4294901760
      %v591 = vsub.f32 %v187, %v590
      %v592 = vand.u32 %v591, 4294901760
      %v593 = vsub.f32 %v591, %v592
      %v594 = vand.u32 %v593, 4294901760
      %595 = vmatpush1.msra.mxu0 %v594
      %v596 = vand.u32 %v190, 4294901760
      %v597 = vsub.f32 %v190, %v596
      %v598 = vand.u32 %v597, 4294901760
      %v599 = vsub.f32 %v597, %v598
      %v600 = vand.u32 %v599, 4294901760
      %601 = vmatprep.subr.mxu0 %v600
      %v602 = vand.u32 %v189, 4294901760
      %v603 = vsub.f32 %v189, %v602
      %v604 = vand.u32 %v603, 4294901760
      %v605 = vsub.f32 %v603, %v604
      %v606 = vand.u32 %v605, 4294901760
      %607 = vmatpush1.msra.mxu0 %v606
      %v608 = vand.u32 %v192, 4294901760
      %v609 = vsub.f32 %v192, %v608
      %v610 = vand.u32 %v609, 4294901760
      %v611 = vsub.f32 %v609, %v610
      %v612 = vand.u32 %v611, 4294901760
      %613 = vmatprep.subr.mxu0 %v612
      %v614 = vand.u32 %v191, 4294901760
      %v615 = vsub.f32 %v191, %v614
      %v616 = vand.u32 %v615, 4294901760
      %v617 = vsub.f32 %v615, %v616
      %v618 = vand.u32 %v617, 4294901760
      %619 = vmatpush1.msra.mxu0 %v618
      %v620 = vand.u32 %v194, 4294901760
      %v621 = vsub.f32 %v194, %v620
      %v622 = vand.u32 %v621, 4294901760
      %v623 = vsub.f32 %v621, %v622
      %v624 = vand.u32 %v623, 4294901760
      %625 = vmatprep.subr.mxu0 %v624
      %v626 = vand.u32 %v193, 4294901760
      %v627 = vsub.f32 %v193, %v626
      %v628 = vand.u32 %v627, 4294901760
      %v629 = vsub.f32 %v627, %v628
      %v630 = vand.u32 %v629, 4294901760
      %631 = vmatpush1.msra.mxu0 %v630
      %v632 = vand.u32 %v196, 4294901760
      %v633 = vsub.f32 %v196, %v632
      %v634 = vand.u32 %v633, 4294901760
      %v635 = vsub.f32 %v633, %v634
      %v636 = vand.u32 %v635, 4294901760
      %637 = vmatprep.subr.mxu0 %v636
      %v638 = vand.u32 %v195, 4294901760
      %v639 = vsub.f32 %v195, %v638
      %v640 = vand.u32 %v639, 4294901760
      %v641 = vsub.f32 %v639, %v640
      %v642 = vand.u32 %v641, 4294901760
      %643 = vmatpush1.msra.mxu0 %v642
      %v644 = vand.u32 %v198, 4294901760
      %v645 = vsub.f32 %v198, %v644
      %v646 = vand.u32 %v645, 4294901760
      %v647 = vsub.f32 %v645, %v646
      %v648 = vand.u32 %v647, 4294901760
      %649 = vmatprep.subr.mxu0 %v648
      %v650 = vand.u32 %v197, 4294901760
      %v651 = vsub.f32 %v197, %v650
      %v652 = vand.u32 %v651, 4294901760
      %v653 = vsub.f32 %v651, %v652
      %v654 = vand.u32 %v653, 4294901760
      %655 = vmatpush1.msra.mxu0 %v654
      %v656 = vand.u32 %v200, 4294901760
      %v657 = vsub.f32 %v200, %v656
      %v658 = vand.u32 %v657, 4294901760
      %v659 = vsub.f32 %v657, %v658
      %v660 = vand.u32 %v659, 4294901760
      %661 = vmatprep.subr.mxu0 %v660
      %v662 = vand.u32 %v199, 4294901760
      %v663 = vsub.f32 %v199, %v662
      %v664 = vand.u32 %v663, 4294901760
      %v665 = vsub.f32 %v663, %v664
      %v666 = vand.u32 %v665, 4294901760
      %667 = vmatpush1.msra.mxu0 %v666
      %v668 = vand.u32 %v202, 4294901760
      %v669 = vsub.f32 %v202, %v668
      %v670 = vand.u32 %v669, 4294901760
      %v671 = vsub.f32 %v669, %v670
      %v672 = vand.u32 %v671, 4294901760
      %673 = vmatprep.subr.mxu0 %v672
      %v674 = vand.u32 %v201, 4294901760
      %v675 = vsub.f32 %v201, %v674
      %v676 = vand.u32 %v675, 4294901760
      %v677 = vsub.f32 %v675, %v676
      %v678 = vand.u32 %v677, 4294901760
      %679 = vmatpush1.msra.mxu0 %v678
      %v680 = vand.u32 %v204, 4294901760
      %v681 = vsub.f32 %v204, %v680
      %v682 = vand.u32 %v681, 4294901760
      %v683 = vsub.f32 %v681, %v682
      %v684 = vand.u32 %v683, 4294901760
      %685 = vmatprep.subr.mxu0 %v684
      %v686 = vand.u32 %v203, 4294901760
      %v687 = vsub.f32 %v203, %v686
      %v688 = vand.u32 %v687, 4294901760
      %v689 = vsub.f32 %v687, %v688
      %v690 = vand.u32 %v689, 4294901760
      %691 = vmatpush1.msra.mxu0 %v690
      %v692 = vand.u32 %v206, 4294901760
      %v693 = vsub.f32 %v206, %v692
      %v694 = vand.u32 %v693, 4294901760
      %v695 = vsub.f32 %v693, %v694
      %v696 = vand.u32 %v695, 4294901760
      %697 = vmatprep.subr.mxu0 %v696
      %v698 = vand.u32 %v205, 4294901760
      %v699 = vsub.f32 %v205, %v698
      %v700 = vand.u32 %v699, 4294901760
      %v701 = vsub.f32 %v699, %v700
      %v702 = vand.u32 %v701, 4294901760
      %703 = vmatpush1.msra.mxu0 %v702
      %v704 = vand.u32 %v208, 4294901760
      %v705 = vsub.f32 %v208, %v704
      %v706 = vand.u32 %v705, 4294901760
      %v707 = vsub.f32 %v705, %v706
      %v708 = vand.u32 %v707, 4294901760
      %709 = vmatprep.subr.mxu0 %v708
      %v710 = vand.u32 %v207, 4294901760
      %v711 = vsub.f32 %v207, %v710
      %v712 = vand.u32 %v711, 4294901760
      %v713 = vsub.f32 %v711, %v712
      %v714 = vand.u32 %v713, 4294901760
      %715 = vmatpush1.msra.mxu0 %v714
      %v716 = vand.u32 %v210, 4294901760
      %v717 = vsub.f32 %v210, %v716
      %v718 = vand.u32 %v717, 4294901760
      %v719 = vsub.f32 %v717, %v718
      %v720 = vand.u32 %v719, 4294901760
      %721 = vmatprep.subr.mxu0 %v720
      %v722 = vand.u32 %v209, 4294901760
      %v723 = vsub.f32 %v209, %v722
      %v724 = vand.u32 %v723, 4294901760
      %v725 = vsub.f32 %v723, %v724
      %v726 = vand.u32 %v725, 4294901760
      %727 = vmatpush1.msra.mxu0 %v726
      %v728 = vand.u32 %v212, 4294901760
      %v729 = vsub.f32 %v212, %v728
      %v730 = vand.u32 %v729, 4294901760
      %v731 = vsub.f32 %v729, %v730
      %v732 = vand.u32 %v731, 4294901760
      %733 = vmatprep.subr.mxu0 %v732
      %v734 = vand.u32 %v211, 4294901760
      %v735 = vsub.f32 %v211, %v734
      %v736 = vand.u32 %v735, 4294901760
      %v737 = vsub.f32 %v735, %v736
      %v738 = vand.u32 %v737, 4294901760
      %739 = vmatpush1.msra.mxu0 %v738
      %v740 = vand.u32 %v214, 4294901760
      %v741 = vsub.f32 %v214, %v740
      %v742 = vand.u32 %v741, 4294901760
      %v743 = vsub.f32 %v741, %v742
      %v744 = vand.u32 %v743, 4294901760
      %745 = vmatprep.subr.mxu0 %v744
      %v746 = vand.u32 %v213, 4294901760
      %v747 = vsub.f32 %v213, %v746
      %v748 = vand.u32 %v747, 4294901760
      %v749 = vsub.f32 %v747, %v748
      %v750 = vand.u32 %v749, 4294901760
      %751 = vmatpush1.msra.mxu0 %v750
      %v752 = vand.u32 %v216, 4294901760
      %v753 = vsub.f32 %v216, %v752
      %v754 = vand.u32 %v753, 4294901760
      %v755 = vsub.f32 %v753, %v754
      %v756 = vand.u32 %v755, 4294901760
      %757 = vmatprep.subr.mxu0 %v756
      %v758 = vand.u32 %v215, 4294901760
      %v759 = vsub.f32 %v215, %v758
      %v760 = vand.u32 %v759, 4294901760
      %v761 = vsub.f32 %v759, %v760
      %v762 = vand.u32 %v761, 4294901760
      %763 = vmatpush1.msra.mxu0 %v762
      %v764 = vand.u32 %v218, 4294901760
      %v765 = vsub.f32 %v218, %v764
      %v766 = vand.u32 %v765, 4294901760
      %v767 = vsub.f32 %v765, %v766
      %v768 = vand.u32 %v767, 4294901760
      %769 = vmatprep.subr.mxu0 %v768
      %v770 = vand.u32 %v217, 4294901760
      %v771 = vsub.f32 %v217, %v770
      %v772 = vand.u32 %v771, 4294901760
      %v773 = vsub.f32 %v771, %v772
      %v774 = vand.u32 %v773, 4294901760
      %775 = vmatpush1.msra.mxu0 %v774
      %v776 = vand.u32 %v220, 4294901760
      %v777 = vsub.f32 %v220, %v776
      %v778 = vand.u32 %v777, 4294901760
      %v779 = vsub.f32 %v777, %v778
      %v780 = vand.u32 %v779, 4294901760
      %781 = vmatprep.subr.mxu0 %v780
      %v782 = vand.u32 %v219, 4294901760
      %v783 = vsub.f32 %v219, %v782
      %v784 = vand.u32 %v783, 4294901760
      %v785 = vsub.f32 %v783, %v784
      %v786 = vand.u32 %v785, 4294901760
      %787 = vmatpush1.msra.mxu0 %v786
      %v788 = vand.u32 %v222, 4294901760
      %v789 = vsub.f32 %v222, %v788
      %v790 = vand.u32 %v789, 4294901760
      %v791 = vsub.f32 %v789, %v790
      %v792 = vand.u32 %v791, 4294901760
      %793 = vmatprep.subr.mxu0 %v792
      %v794 = vand.u32 %v221, 4294901760
      %v795 = vsub.f32 %v221, %v794
      %v796 = vand.u32 %v795, 4294901760
      %v797 = vsub.f32 %v795, %v796
      %v798 = vand.u32 %v797, 4294901760
      %799 = vmatpush1.msra.mxu0 %v798
      %v800 = vand.u32 %v224, 4294901760
      %v801 = vsub.f32 %v224, %v800
      %v802 = vand.u32 %v801, 4294901760
      %v803 = vsub.f32 %v801, %v802
      %v804 = vand.u32 %v803, 4294901760
      %805 = vmatprep.subr.mxu0 %v804
      %v806 = vand.u32 %v223, 4294901760
      %v807 = vsub.f32 %v223, %v806
      %v808 = vand.u32 %v807, 4294901760
      %v809 = vsub.f32 %v807, %v808
      %v810 = vand.u32 %v809, 4294901760
      %811 = vmatpush1.msra.mxu0 %v810
      %v812 = vand.u32 %v153, 4294901760
      %813 = vmatprep.mubr.f32.mxu0 %v812
      %v814 = vand.u32 %v152, 4294901760
      %815 = vmatmul.mubr.f32.gmra.mrb[0].mxu0 %v814
      %v816 = vpop.f32.mrb[0].mxu0
      %v817 = vadd.f32 %v392, %v816
      %v818 = vpop.f32.mrb[0].mxu0
      %v819 = vadd.f32 %v394, %v818
      %v820 = vand.u32 %v156, 4294901760
      %821 = vmatprep.mubr.f32.mxu0 %v820
      %v822 = vand.u32 %v155, 4294901760
      %823 = vmatmul.mubr.f32.gmra.mrb[0].mxu0 %v822
      %v824 = vpop.f32.mrb[0].mxu0
      %v825 = vadd.f32 %v408, %v824
      %v826 = vpop.f32.mrb[0].mxu0
      %v827 = vadd.f32 %v410, %v826
      %v828 = vand.u32 %v159, 4294901760
      %829 = vmatprep.mubr.f32.mxu0 %v828
      %v830 = vand.u32 %v158, 4294901760
      %831 = vmatmul.mubr.f32.gmra.mrb[0].mxu0 %v830
      %v832 = vpop.f32.mrb[0].mxu0
      %v833 = vadd.f32 %v424, %v832
      %v834 = vpop.f32.mrb[0].mxu0
      %v835 = vadd.f32 %v426, %v834
      %836 = vdwg.mxu0
      %v837 = vand.u32 %v162, 4294901760
      %v838 = vsub.f32 %v162, %v837
      %839 = vmatprep.subr.mxu0 %v838
      %v840 = vand.u32 %v161, 4294901760
      %v841 = vsub.f32 %v161, %v840
      %842 = vmatpush1.msra.mxu0 %v841
      %v843 = vand.u32 %v164, 4294901760
      %v844 = vsub.f32 %v164, %v843
      %845 = vmatprep.subr.mxu0 %v844
      %v846 = vand.u32 %v163, 4294901760
      %v847 = vsub.f32 %v163, %v846
      %848 = vmatpush1.msra.mxu0 %v847
      %v849 = vand.u32 %v166, 4294901760
      %v850 = vsub.f32 %v166, %v849
      %851 = vmatprep.subr.mxu0 %v850
      %v852 = vand.u32 %v165, 4294901760
      %v853 = vsub.f32 %v165, %v852
      %854 = vmatpush1.msra.mxu0 %v853
      %v855 = vand.u32 %v168, 4294901760
      %v856 = vsub.f32 %v168, %v855
      %857 = vmatprep.subr.mxu0 %v856
      %v858 = vand.u32 %v167, 4294901760
      %v859 = vsub.f32 %v167, %v858
      %860 = vmatpush1.msra.mxu0 %v859
      %v861 = vand.u32 %v170, 4294901760
      %v862 = vsub.f32 %v170, %v861
      %863 = vmatprep.subr.mxu0 %v862
      %v864 = vand.u32 %v169, 4294901760
      %v865 = vsub.f32 %v169, %v864
      %866 = vmatpush1.msra.mxu0 %v865
      %v867 = vand.u32 %v172, 4294901760
      %v868 = vsub.f32 %v172, %v867
      %869 = vmatprep.subr.mxu0 %v868
      %v870 = vand.u32 %v171, 4294901760
      %v871 = vsub.f32 %v171, %v870
      %872 = vmatpush1.msra.mxu0 %v871
      %v873 = vand.u32 %v174, 4294901760
      %v874 = vsub.f32 %v174, %v873
      %875 = vmatprep.subr.mxu0 %v874
      %v876 = vand.u32 %v173, 4294901760
      %v877 = vsub.f32 %v173, %v876
      %878 = vmatpush1.msra.mxu0 %v877
      %v879 = vand.u32 %v176, 4294901760
      %v880 = vsub.f32 %v176, %v879
      %881 = vmatprep.subr.mxu0 %v880
      %v882 = vand.u32 %v175, 4294901760
      %v883 = vsub.f32 %v175, %v882
      %884 = vmatpush1.msra.mxu0 %v883
      %v885 = vand.u32 %v178, 4294901760
      %v886 = vsub.f32 %v178, %v885
      %887 = vmatprep.subr.mxu0 %v886
      %v888 = vand.u32 %v177, 4294901760
      %v889 = vsub.f32 %v177, %v888
      %890 = vmatpush1.msra.mxu0 %v889
      %v891 = vand.u32 %v180, 4294901760
      %v892 = vsub.f32 %v180, %v891
      %893 = vmatprep.subr.mxu0 %v892
      %v894 = vand.u32 %v179, 4294901760
      %v895 = vsub.f32 %v179, %v894
      %896 = vmatpush1.msra.mxu0 %v895
      %v897 = vand.u32 %v182, 4294901760
      %v898 = vsub.f32 %v182, %v897
      %899 = vmatprep.subr.mxu0 %v898
      %v900 = vand.u32 %v181, 4294901760
      %v901 = vsub.f32 %v181, %v900
      %902 = vmatpush1.msra.mxu0 %v901
      %v903 = vand.u32 %v184, 4294901760
      %v904 = vsub.f32 %v184, %v903
      %905 = vmatprep.subr.mxu0 %v904
      %v906 = vand.u32 %v183, 4294901760
      %v907 = vsub.f32 %v183, %v906
      %908 = vmatpush1.msra.mxu0 %v907
      %v909 = vand.u32 %v186, 4294901760
      %v910 = vsub.f32 %v186, %v909
      %911 = vmatprep.subr.mxu0 %v910
      %v912 = vand.u32 %v185, 4294901760
      %v913 = vsub.f32 %v185, %v912
      %914 = vmatpush1.msra.mxu0 %v913
      %v915 = vand.u32 %v188, 4294901760
      %v916 = vsub.f32 %v188, %v915
      %917 = vmatprep.subr.mxu0 %v916
      %v918 = vand.u32 %v187, 4294901760
      %v919 = vsub.f32 %v187, %v918
      %920 = vmatpush1.msra.mxu0 %v919
      %v921 = vand.u32 %v190, 4294901760
      %v922 = vsub.f32 %v190, %v921
      %923 = vmatprep.subr.mxu0 %v922
      %v924 = vand.u32 %v189, 4294901760
      %v925 = vsub.f32 %v189, %v924
      %926 = vmatpush1.msra.mxu0 %v925
      %v927 = vand.u32 %v192, 4294901760
      %v928 = vsub.f32 %v192, %v927
      %929 = vmatprep.subr.mxu0 %v928
      %v930 = vand.u32 %v191, 4294901760
      %v931 = vsub.f32 %v191, %v930
      %932 = vmatpush1.msra.mxu0 %v931
      %v933 = vand.u32 %v194, 4294901760
      %v934 = vsub.f32 %v194, %v933
      %935 = vmatprep.subr.mxu0 %v934
      %v936 = vand.u32 %v193, 4294901760
      %v937 = vsub.f32 %v193, %v936
      %938 = vmatpush1.msra.mxu0 %v937
      %v939 = vand.u32 %v196, 4294901760
      %v940 = vsub.f32 %v196, %v939
      %941 = vmatprep.subr.mxu0 %v940
      %v942 = vand.u32 %v195, 4294901760
      %v943 = vsub.f32 %v195, %v942
      %944 = vmatpush1.msra.mxu0 %v943
      %v945 = vand.u32 %v198, 4294901760
      %v946 = vsub.f32 %v198, %v945
      %947 = vmatprep.subr.mxu0 %v946
      %v948 = vand.u32 %v197, 4294901760
      %v949 = vsub.f32 %v197, %v948
      %950 = vmatpush1.msra.mxu0 %v949
      %v951 = vand.u32 %v200, 4294901760
      %v952 = vsub.f32 %v200, %v951
      %953 = vmatprep.subr.mxu0 %v952
      %v954 = vand.u32 %v199, 4294901760
      %v955 = vsub.f32 %v199, %v954
      %956 = vmatpush1.msra.mxu0 %v955
      %v957 = vand.u32 %v202, 4294901760
      %v958 = vsub.f32 %v202, %v957
      %959 = vmatprep.subr.mxu0 %v958
      %v960 = vand.u32 %v201, 4294901760
      %v961 = vsub.f32 %v201, %v960
      %962 = vmatpush1.msra.mxu0 %v961
      %v963 = vand.u32 %v204, 4294901760
      %v964 = vsub.f32 %v204, %v963
      %965 = vmatprep.subr.mxu0 %v964
      %v966 = vand.u32 %v203, 4294901760
      %v967 = vsub.f32 %v203, %v966
      %968 = vmatpush1.msra.mxu0 %v967
      %v969 = vand.u32 %v206, 4294901760
      %v970 = vsub.f32 %v206, %v969
      %971 = vmatprep.subr.mxu0 %v970
      %v972 = vand.u32 %v205, 4294901760
      %v973 = vsub.f32 %v205, %v972
      %974 = vmatpush1.msra.mxu0 %v973
      %v975 = vand.u32 %v208, 4294901760
      %v976 = vsub.f32 %v208, %v975
      %977 = vmatprep.subr.mxu0 %v976
      %v978 = vand.u32 %v207, 4294901760
      %v979 = vsub.f32 %v207, %v978
      %980 = vmatpush1.msra.mxu0 %v979
      %v981 = vand.u32 %v210, 4294901760
      %v982 = vsub.f32 %v210, %v981
      %983 = vmatprep.subr.mxu0 %v982
      %v984 = vand.u32 %v209, 4294901760
      %v985 = vsub.f32 %v209, %v984
      %986 = vmatpush1.msra.mxu0 %v985
      %v987 = vand.u32 %v212, 4294901760
      %v988 = vsub.f32 %v212, %v987
      %989 = vmatprep.subr.mxu0 %v988
      %v990 = vand.u32 %v211, 4294901760
      %v991 = vsub.f32 %v211, %v990
      %992 = vmatpush1.msra.mxu0 %v991
      %v993 = vand.u32 %v214, 4294901760
      %v994 = vsub.f32 %v214, %v993
      %995 = vmatprep.subr.mxu0 %v994
      %v996 = vand.u32 %v213, 4294901760
      %v997 = vsub.f32 %v213, %v996
      %998 = vmatpush1.msra.mxu0 %v997
      %v999 = vand.u32 %v216, 4294901760
      %v1000 = vsub.f32 %v216, %v999
      %1001 = vmatprep.subr.mxu0 %v1000
      %v1002 = vand.u32 %v215, 4294901760
      %v1003 = vsub.f32 %v215, %v1002
      %1004 = vmatpush1.msra.mxu0 %v1003
      %v1005 = vand.u32 %v218, 4294901760
      %v1006 = vsub.f32 %v218, %v1005
      %1007 = vmatprep.subr.mxu0 %v1006
      %v1008 = vand.u32 %v217, 4294901760
      %v1009 = vsub.f32 %v217, %v1008
      %1010 = vmatpush1.msra.mxu0 %v1009
      %v1011 = vand.u32 %v220, 4294901760
      %v1012 = vsub.f32 %v220, %v1011
      %1013 = vmatprep.subr.mxu0 %v1012
      %v1014 = vand.u32 %v219, 4294901760
      %v1015 = vsub.f32 %v219, %v1014
      %1016 = vmatpush1.msra.mxu0 %v1015
      %v1017 = vand.u32 %v222, 4294901760
      %v1018 = vsub.f32 %v222, %v1017
      %1019 = vmatprep.subr.mxu0 %v1018
      %v1020 = vand.u32 %v221, 4294901760
      %v1021 = vsub.f32 %v221, %v1020
      %1022 = vmatpush1.msra.mxu0 %v1021
      %v1023 = vand.u32 %v224, 4294901760
      %v1024 = vsub.f32 %v224, %v1023
      %1025 = vmatprep.subr.mxu0 %v1024
      %v1026 = vand.u32 %v223, 4294901760
      %v1027 = vsub.f32 %v223, %v1026
      %1028 = vmatpush1.msra.mxu0 %v1027
      %v1029 = vand.u32 %v153, 4294901760
      %v1030 = vsub.f32 %v153, %v1029
      %1031 = vmatprep.mubr.f32.mxu0 %v1030
      %v1032 = vand.u32 %v152, 4294901760
      %v1033 = vsub.f32 %v152, %v1032
      %1034 = vmatmul.mubr.f32.gmra.mrb[0].mxu0 %v1033
      %v1035 = vpop.f32.mrb[0].mxu0
      %v1036 = vadd.f32 %v817, %v1035
      %v1037 = vpop.f32.mrb[0].mxu0
      %v1038 = vadd.f32 %v819, %v1037
      %v1039 = vand.u32 %v156, 4294901760
      %v1040 = vsub.f32 %v156, %v1039
      %1041 = vmatprep.mubr.f32.mxu0 %v1040
      %v1042 = vand.u32 %v155, 4294901760
      %v1043 = vsub.f32 %v155, %v1042
      %1044 = vmatmul.mubr.f32.gmra.mrb[0].mxu0 %v1043
      %v1045 = vpop.f32.mrb[0].mxu0
      %v1046 = vadd.f32 %v825, %v1045
      %v1047 = vpop.f32.mrb[0].mxu0
      %v1048 = vadd.f32 %v827, %v1047
      %v1049 = vand.u32 %v159, 4294901760
      %v1050 = vsub.f32 %v159, %v1049
      %1051 = vmatprep.mubr.f32.mxu0 %v1050
      %v1052 = vand.u32 %v158, 4294901760
      %v1053 = vsub.f32 %v158, %v1052
      %1054 = vmatmul.mubr.f32.gmra.mrb[0].mxu0 %v1053
      %v1055 = vpop.f32.mrb[0].mxu0
      %v1056 = vadd.f32 %v833, %v1055
      %v1057 = vpop.f32.mrb[0].mxu0
      %v1058 = vadd.f32 %v835, %v1057
      %1059 = vdwg.mxu0
      %v1060 = vand.u32 %v162, 4294901760
      %1061 = vmatprep.subr.mxu0 %v1060
      %v1062 = vand.u32 %v161, 4294901760
      %1063 = vmatpush1.msra.mxu0 %v1062
      %v1064 = vand.u32 %v164, 4294901760
      %1065 = vmatprep.subr.mxu0 %v1064
      %v1066 = vand.u32 %v163, 4294901760
      %1067 = vmatpush1.msra.mxu0 %v1066
      %v1068 = vand.u32 %v166, 4294901760
      %1069 = vmatprep.subr.mxu0 %v1068
      %v1070 = vand.u32 %v165, 4294901760
      %1071 = vmatpush1.msra.mxu0 %v1070
      %v1072 = vand.u32 %v168, 4294901760
      %1073 = vmatprep.subr.mxu0 %v1072
      %v1074 = vand.u32 %v167, 4294901760
      %1075 = vmatpush1.msra.mxu0 %v1074
      %v1076 = vand.u32 %v170, 4294901760
      %1077 = vmatprep.subr.mxu0 %v1076
      %v1078 = vand.u32 %v169, 4294901760
      %1079 = vmatpush1.msra.mxu0 %v1078
      %v1080 = vand.u32 %v172, 4294901760
      %1081 = vmatprep.subr.mxu0 %v1080
      %v1082 = vand.u32 %v171, 4294901760
      %1083 = vmatpush1.msra.mxu0 %v1082
      %v1084 = vand.u32 %v174, 4294901760
      %1085 = vmatprep.subr.mxu0 %v1084
      %v1086 = vand.u32 %v173, 4294901760
      %1087 = vmatpush1.msra.mxu0 %v1086
      %v1088 = vand.u32 %v176, 4294901760
      %1089 = vmatprep.subr.mxu0 %v1088
      %v1090 = vand.u32 %v175, 4294901760
      %1091 = vmatpush1.msra.mxu0 %v1090
      %v1092 = vand.u32 %v178, 4294901760
      %1093 = vmatprep.subr.mxu0 %v1092
      %v1094 = vand.u32 %v177, 4294901760
      %1095 = vmatpush1.msra.mxu0 %v1094
      %v1096 = vand.u32 %v180, 4294901760
      %1097 = vmatprep.subr.mxu0 %v1096
      %v1098 = vand.u32 %v179, 4294901760
      %1099 = vmatpush1.msra.mxu0 %v1098
      %v1100 = vand.u32 %v182, 4294901760
      %1101 = vmatprep.subr.mxu0 %v1100
      %v1102 = vand.u32 %v181, 4294901760
      %1103 = vmatpush1.msra.mxu0 %v1102
      %v1104 = vand.u32 %v184, 4294901760
      %1105 = vmatprep.subr.mxu0 %v1104
      %v1106 = vand.u32 %v183, 4294901760
      %1107 = vmatpush1.msra.mxu0 %v1106
      %v1108 = vand.u32 %v186, 4294901760
      %1109 = vmatprep.subr.mxu0 %v1108
      %v1110 = vand.u32 %v185, 4294901760
      %1111 = vmatpush1.msra.mxu0 %v1110
      %v1112 = vand.u32 %v188, 4294901760
      %1113 = vmatprep.subr.mxu0 %v1112
      %v1114 = vand.u32 %v187, 4294901760
      %1115 = vmatpush1.msra.mxu0 %v1114
      %v1116 = vand.u32 %v190, 4294901760
      %1117 = vmatprep.subr.mxu0 %v1116
      %v1118 = vand.u32 %v189, 4294901760
      %1119 = vmatpush1.msra.mxu0 %v1118
      %v1120 = vand.u32 %v192, 4294901760
      %1121 = vmatprep.subr.mxu0 %v1120
      %v1122 = vand.u32 %v191, 4294901760
      %1123 = vmatpush1.msra.mxu0 %v1122
      %v1124 = vand.u32 %v194, 4294901760
      %1125 = vmatprep.subr.mxu0 %v1124
      %v1126 = vand.u32 %v193, 4294901760
      %1127 = vmatpush1.msra.mxu0 %v1126
      %v1128 = vand.u32 %v196, 4294901760
      %1129 = vmatprep.subr.mxu0 %v1128
      %v1130 = vand.u32 %v195, 4294901760
      %1131 = vmatpush1.msra.mxu0 %v1130
      %v1132 = vand.u32 %v198, 4294901760
      %1133 = vmatprep.subr.mxu0 %v1132
      %v1134 = vand.u32 %v197, 4294901760
      %1135 = vmatpush1.msra.mxu0 %v1134
      %v1136 = vand.u32 %v200, 4294901760
      %1137 = vmatprep.subr.mxu0 %v1136
      %v1138 = vand.u32 %v199, 4294901760
      %1139 = vmatpush1.msra.mxu0 %v1138
      %v1140 = vand.u32 %v202, 4294901760
      %1141 = vmatprep.subr.mxu0 %v1140
      %v1142 = vand.u32 %v201, 4294901760
      %1143 = vmatpush1.msra.mxu0 %v1142
      %v1144 = vand.u32 %v204, 4294901760
      %1145 = vmatprep.subr.mxu0 %v1144
      %v1146 = vand.u32 %v203, 4294901760
      %1147 = vmatpush1.msra.mxu0 %v1146
      %v1148 = vand.u32 %v206, 4294901760
      %1149 = vmatprep.subr.mxu0 %v1148
      %v1150 = vand.u32 %v205, 4294901760
      %1151 = vmatpush1.msra.mxu0 %v1150
      %v1152 = vand.u32 %v208, 4294901760
      %1153 = vmatprep.subr.mxu0 %v1152
      %v1154 = vand.u32 %v207, 4294901760
      %1155 = vmatpush1.msra.mxu0 %v1154
      %v1156 = vand.u32 %v210, 4294901760
      %1157 = vmatprep.subr.mxu0 %v1156
      %v1158 = vand.u32 %v209, 4294901760
      %1159 = vmatpush1.msra.mxu0 %v1158
      %v1160 = vand.u32 %v212, 4294901760
      %1161 = vmatprep.subr.mxu0 %v1160
      %v1162 = vand.u32 %v211, 4294901760
      %1163 = vmatpush1.msra.mxu0 %v1162
      %v1164 = vand.u32 %v214, 4294901760
      %1165 = vmatprep.subr.mxu0 %v1164
      %v1166 = vand.u32 %v213, 4294901760
      %1167 = vmatpush1.msra.mxu0 %v1166
      %v1168 = vand.u32 %v216, 4294901760
      %1169 = vmatprep.subr.mxu0 %v1168
      %v1170 = vand.u32 %v215, 4294901760
      %1171 = vmatpush1.msra.mxu0 %v1170
      %v1172 = vand.u32 %v218, 4294901760
      %1173 = vmatprep.subr.mxu0 %v1172
      %v1174 = vand.u32 %v217, 4294901760
      %1175 = vmatpush1.msra.mxu0 %v1174
      %v1176 = vand.u32 %v220, 4294901760
      %1177 = vmatprep.subr.mxu0 %v1176
      %v1178 = vand.u32 %v219, 4294901760
      %1179 = vmatpush1.msra.mxu0 %v1178
      %v1180 = vand.u32 %v222, 4294901760
      %1181 = vmatprep.subr.mxu0 %v1180
      %v1182 = vand.u32 %v221, 4294901760
      %1183 = vmatpush1.msra.mxu0 %v1182
      %v1184 = vand.u32 %v224, 4294901760
      %1185 = vmatprep.subr.mxu0 %v1184
      %v1186 = vand.u32 %v223, 4294901760
      %1187 = vmatpush1.msra.mxu0 %v1186
      %v1188 = vand.u32 %v153, 4294901760
      %v1189 = vsub.f32 %v153, %v1188
      %v1190 = vand.u32 %v1189, 4294901760
      %1191 = vmatprep.mubr.f32.mxu0 %v1190
      %v1192 = vand.u32 %v152, 4294901760
      %v1193 = vsub.f32 %v152, %v1192
      %v1194 = vand.u32 %v1193, 4294901760
      %1195 = vmatmul.mubr.f32.gmra.mrb[0].mxu0 %v1194
      %v1196 = vpop.f32.mrb[0].mxu0
      %v1197 = vadd.f32 %v1036, %v1196
      %v1198 = vpop.f32.mrb[0].mxu0
      %v1199 = vadd.f32 %v1038, %v1198
      %v1200 = vand.u32 %v156, 4294901760
      %v1201 = vsub.f32 %v156, %v1200
      %v1202 = vand.u32 %v1201, 4294901760
      %1203 = vmatprep.mubr.f32.mxu0 %v1202
      %v1204 = vand.u32 %v155, 4294901760
      %v1205 = vsub.f32 %v155, %v1204
      %v1206 = vand.u32 %v1205, 4294901760
      %1207 = vmatmul.mubr.f32.gmra.mrb[0].mxu0 %v1206
      %v1208 = vpop.f32.mrb[0].mxu0
      %v1209 = vadd.f32 %v1046, %v1208
      %v1210 = vpop.f32.mrb[0].mxu0
      %v1211 = vadd.f32 %v1048, %v1210
      %v1212 = vand.u32 %v159, 4294901760
      %v1213 = vsub.f32 %v159, %v1212
      %v1214 = vand.u32 %v1213, 4294901760
      %1215 = vmatprep.mubr.f32.mxu0 %v1214
      %v1216 = vand.u32 %v158, 4294901760
      %v1217 = vsub.f32 %v158, %v1216
      %v1218 = vand.u32 %v1217, 4294901760
      %1219 = vmatmul.mubr.f32.gmra.mrb[0].mxu0 %v1218
      %v1220 = vpop.f32.mrb[0].mxu0
      %v1221 = vadd.f32 %v1056, %v1220
      %v1222 = vpop.f32.mrb[0].mxu0
      %v1223 = vadd.f32 %v1058, %v1222
      %1224 = vdwg.mxu0
      %v1225 = vand.u32 %v162, 4294901760
      %v1226 = vsub.f32 %v162, %v1225
      %v1227 = vand.u32 %v1226, 4294901760
      %1228 = vmatprep.subr.mxu0 %v1227
      %v1229 = vand.u32 %v161, 4294901760
      %v1230 = vsub.f32 %v161, %v1229
      %v1231 = vand.u32 %v1230, 4294901760
      %1232 = vmatpush1.msra.mxu0 %v1231
      %v1233 = vand.u32 %v164, 4294901760
      %v1234 = vsub.f32 %v164, %v1233
      %v1235 = vand.u32 %v1234, 4294901760
      %1236 = vmatprep.subr.mxu0 %v1235
      %v1237 = vand.u32 %v163, 4294901760
      %v1238 = vsub.f32 %v163, %v1237
      %v1239 = vand.u32 %v1238, 4294901760
      %1240 = vmatpush1.msra.mxu0 %v1239
      %v1241 = vand.u32 %v166, 4294901760
      %v1242 = vsub.f32 %v166, %v1241
      %v1243 = vand.u32 %v1242, 4294901760
      %1244 = vmatprep.subr.mxu0 %v1243
      %v1245 = vand.u32 %v165, 4294901760
      %v1246 = vsub.f32 %v165, %v1245
      %v1247 = vand.u32 %v1246, 4294901760
      %1248 = vmatpush1.msra.mxu0 %v1247
      %v1249 = vand.u32 %v168, 4294901760
      %v1250 = vsub.f32 %v168, %v1249
      %v1251 = vand.u32 %v1250, 4294901760
      %1252 = vmatprep.subr.mxu0 %v1251
      %v1253 = vand.u32 %v167, 4294901760
      %v1254 = vsub.f32 %v167, %v1253
      %v1255 = vand.u32 %v1254, 4294901760
      %1256 = vmatpush1.msra.mxu0 %v1255
      %v1257 = vand.u32 %v170, 4294901760
      %v1258 = vsub.f32 %v170, %v1257
      %v1259 = vand.u32 %v1258, 4294901760
      %1260 = vmatprep.subr.mxu0 %v1259
      %v1261 = vand.u32 %v169, 4294901760
      %v1262 = vsub.f32 %v169, %v1261
      %v1263 = vand.u32 %v1262, 4294901760
      %1264 = vmatpush1.msra.mxu0 %v1263
      %v1265 = vand.u32 %v172, 4294901760
      %v1266 = vsub.f32 %v172, %v1265
      %v1267 = vand.u32 %v1266, 4294901760
      %1268 = vmatprep.subr.mxu0 %v1267
      %v1269 = vand.u32 %v171, 4294901760
      %v1270 = vsub.f32 %v171, %v1269
      %v1271 = vand.u32 %v1270, 4294901760
      %1272 = vmatpush1.msra.mxu0 %v1271
      %v1273 = vand.u32 %v174, 4294901760
      %v1274 = vsub.f32 %v174, %v1273
      %v1275 = vand.u32 %v1274, 4294901760
      %1276 = vmatprep.subr.mxu0 %v1275
      %v1277 = vand.u32 %v173, 4294901760
      %v1278 = vsub.f32 %v173, %v1277
      %v1279 = vand.u32 %v1278, 4294901760
      %1280 = vmatpush1.msra.mxu0 %v1279
      %v1281 = vand.u32 %v176, 4294901760
      %v1282 = vsub.f32 %v176, %v1281
      %v1283 = vand.u32 %v1282, 4294901760
      %1284 = vmatprep.subr.mxu0 %v1283
      %v1285 = vand.u32 %v175, 4294901760
      %v1286 = vsub.f32 %v175, %v1285
      %v1287 = vand.u32 %v1286, 4294901760
      %1288 = vmatpush1.msra.mxu0 %v1287
      %v1289 = vand.u32 %v178, 4294901760
      %v1290 = vsub.f32 %v178, %v1289
      %v1291 = vand.u32 %v1290, 4294901760
      %1292 = vmatprep.subr.mxu0 %v1291
      %v1293 = vand.u32 %v177, 4294901760
      %v1294 = vsub.f32 %v177, %v1293
      %v1295 = vand.u32 %v1294, 4294901760
      %1296 = vmatpush1.msra.mxu0 %v1295
      %v1297 = vand.u32 %v180, 4294901760
      %v1298 = vsub.f32 %v180, %v1297
      %v1299 = vand.u32 %v1298, 4294901760
      %1300 = vmatprep.subr.mxu0 %v1299
      %v1301 = vand.u32 %v179, 4294901760
      %v1302 = vsub.f32 %v179, %v1301
      %v1303 = vand.u32 %v1302, 4294901760
      %1304 = vmatpush1.msra.mxu0 %v1303
      %v1305 = vand.u32 %v182, 4294901760
      %v1306 = vsub.f32 %v182, %v1305
      %v1307 = vand.u32 %v1306, 4294901760
      %1308 = vmatprep.subr.mxu0 %v1307
      %v1309 = vand.u32 %v181, 4294901760
      %v1310 = vsub.f32 %v181, %v1309
      %v1311 = vand.u32 %v1310, 4294901760
      %1312 = vmatpush1.msra.mxu0 %v1311
      %v1313 = vand.u32 %v184, 4294901760
      %v1314 = vsub.f32 %v184, %v1313
      %v1315 = vand.u32 %v1314, 4294901760
      %1316 = vmatprep.subr.mxu0 %v1315
      %v1317 = vand.u32 %v183, 4294901760
      %v1318 = vsub.f32 %v183, %v1317
      %v1319 = vand.u32 %v1318, 4294901760
      %1320 = vmatpush1.msra.mxu0 %v1319
      %v1321 = vand.u32 %v186, 4294901760
      %v1322 = vsub.f32 %v186, %v1321
      %v1323 = vand.u32 %v1322, 4294901760
      %1324 = vmatprep.subr.mxu0 %v1323
      %v1325 = vand.u32 %v185, 4294901760
      %v1326 = vsub.f32 %v185, %v1325
      %v1327 = vand.u32 %v1326, 4294901760
      %1328 = vmatpush1.msra.mxu0 %v1327
      %v1329 = vand.u32 %v188, 4294901760
      %v1330 = vsub.f32 %v188, %v1329
      %v1331 = vand.u32 %v1330, 4294901760
      %1332 = vmatprep.subr.mxu0 %v1331
      %v1333 = vand.u32 %v187, 4294901760
      %v1334 = vsub.f32 %v187, %v1333
      %v1335 = vand.u32 %v1334, 4294901760
      %1336 = vmatpush1.msra.mxu0 %v1335
      %v1337 = vand.u32 %v190, 4294901760
      %v1338 = vsub.f32 %v190, %v1337
      %v1339 = vand.u32 %v1338, 4294901760
      %1340 = vmatprep.subr.mxu0 %v1339
      %v1341 = vand.u32 %v189, 4294901760
      %v1342 = vsub.f32 %v189, %v1341
      %v1343 = vand.u32 %v1342, 4294901760
      %1344 = vmatpush1.msra.mxu0 %v1343
      %v1345 = vand.u32 %v192, 4294901760
      %v1346 = vsub.f32 %v192, %v1345
      %v1347 = vand.u32 %v1346, 4294901760
      %1348 = vmatprep.subr.mxu0 %v1347
      %v1349 = vand.u32 %v191, 4294901760
      %v1350 = vsub.f32 %v191, %v1349
      %v1351 = vand.u32 %v1350, 4294901760
      %1352 = vmatpush1.msra.mxu0 %v1351
      %v1353 = vand.u32 %v194, 4294901760
      %v1354 = vsub.f32 %v194, %v1353
      %v1355 = vand.u32 %v1354, 4294901760
      %1356 = vmatprep.subr.mxu0 %v1355
      %v1357 = vand.u32 %v193, 4294901760
      %v1358 = vsub.f32 %v193, %v1357
      %v1359 = vand.u32 %v1358, 4294901760
      %1360 = vmatpush1.msra.mxu0 %v1359
      %v1361 = vand.u32 %v196, 4294901760
      %v1362 = vsub.f32 %v196, %v1361
      %v1363 = vand.u32 %v1362, 4294901760
      %1364 = vmatprep.subr.mxu0 %v1363
      %v1365 = vand.u32 %v195, 4294901760
      %v1366 = vsub.f32 %v195, %v1365
      %v1367 = vand.u32 %v1366, 4294901760
      %1368 = vmatpush1.msra.mxu0 %v1367
      %v1369 = vand.u32 %v198, 4294901760
      %v1370 = vsub.f32 %v198, %v1369
      %v1371 = vand.u32 %v1370, 4294901760
      %1372 = vmatprep.subr.mxu0 %v1371
      %v1373 = vand.u32 %v197, 4294901760
      %v1374 = vsub.f32 %v197, %v1373
      %v1375 = vand.u32 %v1374, 4294901760
      %1376 = vmatpush1.msra.mxu0 %v1375
      %v1377 = vand.u32 %v200, 4294901760
      %v1378 = vsub.f32 %v200, %v1377
      %v1379 = vand.u32 %v1378, 4294901760
      %1380 = vmatprep.subr.mxu0 %v1379
      %v1381 = vand.u32 %v199, 4294901760
      %v1382 = vsub.f32 %v199, %v1381
      %v1383 = vand.u32 %v1382, 4294901760
      %1384 = vmatpush1.msra.mxu0 %v1383
      %v1385 = vand.u32 %v202, 4294901760
      %v1386 = vsub.f32 %v202, %v1385
      %v1387 = vand.u32 %v1386, 4294901760
      %1388 = vmatprep.subr.mxu0 %v1387
      %v1389 = vand.u32 %v201, 4294901760
      %v1390 = vsub.f32 %v201, %v1389
      %v1391 = vand.u32 %v1390, 4294901760
      %1392 = vmatpush1.msra.mxu0 %v1391
      %v1393 = vand.u32 %v204, 4294901760
      %v1394 = vsub.f32 %v204, %v1393
      %v1395 = vand.u32 %v1394, 4294901760
      %1396 = vmatprep.subr.mxu0 %v1395
      %v1397 = vand.u32 %v203, 4294901760
      %v1398 = vsub.f32 %v203, %v1397
      %v1399 = vand.u32 %v1398, 4294901760
      %1400 = vmatpush1.msra.mxu0 %v1399
      %v1401 = vand.u32 %v206, 4294901760
      %v1402 = vsub.f32 %v206, %v1401
      %v1403 = vand.u32 %v1402, 4294901760
      %1404 = vmatprep.subr.mxu0 %v1403
      %v1405 = vand.u32 %v205, 4294901760
      %v1406 = vsub.f32 %v205, %v1405
      %v1407 = vand.u32 %v1406, 4294901760
      %1408 = vmatpush1.msra.mxu0 %v1407
      %v1409 = vand.u32 %v208, 4294901760
      %v1410 = vsub.f32 %v208, %v1409
      %v1411 = vand.u32 %v1410, 4294901760
      %1412 = vmatprep.subr.mxu0 %v1411
      %v1413 = vand.u32 %v207, 4294901760
      %v1414 = vsub.f32 %v207, %v1413
      %v1415 = vand.u32 %v1414, 4294901760
      %1416 = vmatpush1.msra.mxu0 %v1415
      %v1417 = vand.u32 %v210, 4294901760
      %v1418 = vsub.f32 %v210, %v1417
      %v1419 = vand.u32 %v1418, 4294901760
      %1420 = vmatprep.subr.mxu0 %v1419
      %v1421 = vand.u32 %v209, 4294901760
      %v1422 = vsub.f32 %v209, %v1421
      %v1423 = vand.u32 %v1422, 4294901760
      %1424 = vmatpush1.msra.mxu0 %v1423
      %v1425 = vand.u32 %v212, 4294901760
      %v1426 = vsub.f32 %v212, %v1425
      %v1427 = vand.u32 %v1426, 4294901760
      %1428 = vmatprep.subr.mxu0 %v1427
      %v1429 = vand.u32 %v211, 4294901760
      %v1430 = vsub.f32 %v211, %v1429
      %v1431 = vand.u32 %v1430, 4294901760
      %1432 = vmatpush1.msra.mxu0 %v1431
      %v1433 = vand.u32 %v214, 4294901760
      %v1434 = vsub.f32 %v214, %v1433
      %v1435 = vand.u32 %v1434, 4294901760
      %1436 = vmatprep.subr.mxu0 %v1435
      %v1437 = vand.u32 %v213, 4294901760
      %v1438 = vsub.f32 %v213, %v1437
      %v1439 = vand.u32 %v1438, 4294901760
      %1440 = vmatpush1.msra.mxu0 %v1439
      %v1441 = vand.u32 %v216, 4294901760
      %v1442 = vsub.f32 %v216, %v1441
      %v1443 = vand.u32 %v1442, 4294901760
      %1444 = vmatprep.subr.mxu0 %v1443
      %v1445 = vand.u32 %v215, 4294901760
      %v1446 = vsub.f32 %v215, %v1445
      %v1447 = vand.u32 %v1446, 4294901760
      %1448 = vmatpush1.msra.mxu0 %v1447
      %v1449 = vand.u32 %v218, 4294901760
      %v1450 = vsub.f32 %v218, %v1449
      %v1451 = vand.u32 %v1450, 4294901760
      %1452 = vmatprep.subr.mxu0 %v1451
      %v1453 = vand.u32 %v217, 4294901760
      %v1454 = vsub.f32 %v217, %v1453
      %v1455 = vand.u32 %v1454, 4294901760
      %1456 = vmatpush1.msra.mxu0 %v1455
      %v1457 = vand.u32 %v220, 4294901760
      %v1458 = vsub.f32 %v220, %v1457
      %v1459 = vand.u32 %v1458, 4294901760
      %1460 = vmatprep.subr.mxu0 %v1459
      %v1461 = vand.u32 %v219, 4294901760
      %v1462 = vsub.f32 %v219, %v1461
      %v1463 = vand.u32 %v1462, 4294901760
      %1464 = vmatpush1.msra.mxu0 %v1463
      %v1465 = vand.u32 %v222, 4294901760
      %v1466 = vsub.f32 %v222, %v1465
      %v1467 = vand.u32 %v1466, 4294901760
      %1468 = vmatprep.subr.mxu0 %v1467
      %v1469 = vand.u32 %v221, 4294901760
      %v1470 = vsub.f32 %v221, %v1469
      %v1471 = vand.u32 %v1470, 4294901760
      %1472 = vmatpush1.msra.mxu0 %v1471
      %v1473 = vand.u32 %v224, 4294901760
      %v1474 = vsub.f32 %v224, %v1473
      %v1475 = vand.u32 %v1474, 4294901760
      %1476 = vmatprep.subr.mxu0 %v1475
      %v1477 = vand.u32 %v223, 4294901760
      %v1478 = vsub.f32 %v223, %v1477
      %v1479 = vand.u32 %v1478, 4294901760
      %1480 = vmatpush1.msra.mxu0 %v1479
      %v1481 = vand.u32 %v153, 4294901760
      %1482 = vmatprep.mubr.f32.mxu0 %v1481
      %v1483 = vand.u32 %v152, 4294901760
      %1484 = vmatmul.mubr.f32.gmra.mrb[0].mxu0 %v1483
      %v1485 = vpop.f32.mrb[0].mxu0
      %v1486 = vadd.f32 %v1197, %v1485
      %v1487 = vpop.f32.mrb[0].mxu0
      %v1488 = vadd.f32 %v1199, %v1487
      %v1489 = vand.u32 %v156, 4294901760
      %1490 = vmatprep.mubr.f32.mxu0 %v1489
      %v1491 = vand.u32 %v155, 4294901760
      %1492 = vmatmul.mubr.f32.gmra.mrb[0].mxu0 %v1491
      %v1493 = vpop.f32.mrb[0].mxu0
      %v1494 = vadd.f32 %v1209, %v1493
      %v1495 = vpop.f32.mrb[0].mxu0
      %v1496 = vadd.f32 %v1211, %v1495
      %v1497 = vand.u32 %v159, 4294901760
      %1498 = vmatprep.mubr.f32.mxu0 %v1497
      %v1499 = vand.u32 %v158, 4294901760
      %1500 = vmatmul.mubr.f32.gmra.mrb[0].mxu0 %v1499
      %v1501 = vpop.f32.mrb[0].mxu0
      %v1502 = vadd.f32 %v1221, %v1501
      %v1503 = vpop.f32.mrb[0].mxu0
      %v1504 = vadd.f32 %v1223, %v1503
      %1505 = vdwg.mxu0
      %v1506 = vand.u32 %v162, 4294901760
      %1507 = vmatprep.subr.mxu0 %v1506
      %v1508 = vand.u32 %v161, 4294901760
      %1509 = vmatpush1.msra.mxu0 %v1508
      %v1510 = vand.u32 %v164, 4294901760
      %1511 = vmatprep.subr.mxu0 %v1510
      %v1512 = vand.u32 %v163, 4294901760
      %1513 = vmatpush1.msra.mxu0 %v1512
      %v1514 = vand.u32 %v166, 4294901760
      %1515 = vmatprep.subr.mxu0 %v1514
      %v1516 = vand.u32 %v165, 4294901760
      %1517 = vmatpush1.msra.mxu0 %v1516
      %v1518 = vand.u32 %v168, 4294901760
      %1519 = vmatprep.subr.mxu0 %v1518
      %v1520 = vand.u32 %v167, 4294901760
      %1521 = vmatpush1.msra.mxu0 %v1520
      %v1522 = vand.u32 %v170, 4294901760
      %1523 = vmatprep.subr.mxu0 %v1522
      %v1524 = vand.u32 %v169, 4294901760
      %1525 = vmatpush1.msra.mxu0 %v1524
      %v1526 = vand.u32 %v172, 4294901760
      %1527 = vmatprep.subr.mxu0 %v1526
      %v1528 = vand.u32 %v171, 4294901760
      %1529 = vmatpush1.msra.mxu0 %v1528
      %v1530 = vand.u32 %v174, 4294901760
      %1531 = vmatprep.subr.mxu0 %v1530
      %v1532 = vand.u32 %v173, 4294901760
      %1533 = vmatpush1.msra.mxu0 %v1532
      %v1534 = vand.u32 %v176, 4294901760
      %1535 = vmatprep.subr.mxu0 %v1534
      %v1536 = vand.u32 %v175, 4294901760
      %1537 = vmatpush1.msra.mxu0 %v1536
      %v1538 = vand.u32 %v178, 4294901760
      %1539 = vmatprep.subr.mxu0 %v1538
      %v1540 = vand.u32 %v177, 4294901760
      %1541 = vmatpush1.msra.mxu0 %v1540
      %v1542 = vand.u32 %v180, 4294901760
      %1543 = vmatprep.subr.mxu0 %v1542
      %v1544 = vand.u32 %v179, 4294901760
      %1545 = vmatpush1.msra.mxu0 %v1544
      %v1546 = vand.u32 %v182, 4294901760
      %1547 = vmatprep.subr.mxu0 %v1546
      %v1548 = vand.u32 %v181, 4294901760
      %1549 = vmatpush1.msra.mxu0 %v1548
      %v1550 = vand.u32 %v184, 4294901760
      %1551 = vmatprep.subr.mxu0 %v1550
      %v1552 = vand.u32 %v183, 4294901760
      %1553 = vmatpush1.msra.mxu0 %v1552
      %v1554 = vand.u32 %v186, 4294901760
      %1555 = vmatprep.subr.mxu0 %v1554
      %v1556 = vand.u32 %v185, 4294901760
      %1557 = vmatpush1.msra.mxu0 %v1556
      %v1558 = vand.u32 %v188, 4294901760
      %1559 = vmatprep.subr.mxu0 %v1558
      %v1560 = vand.u32 %v187, 4294901760
      %1561 = vmatpush1.msra.mxu0 %v1560
      %v1562 = vand.u32 %v190, 4294901760
      %1563 = vmatprep.subr.mxu0 %v1562
      %v1564 = vand.u32 %v189, 4294901760
      %1565 = vmatpush1.msra.mxu0 %v1564
      %v1566 = vand.u32 %v192, 4294901760
      %1567 = vmatprep.subr.mxu0 %v1566
      %v1568 = vand.u32 %v191, 4294901760
      %1569 = vmatpush1.msra.mxu0 %v1568
      %v1570 = vand.u32 %v194, 4294901760
      %1571 = vmatprep.subr.mxu0 %v1570
      %v1572 = vand.u32 %v193, 4294901760
      %1573 = vmatpush1.msra.mxu0 %v1572
      %v1574 = vand.u32 %v196, 4294901760
      %1575 = vmatprep.subr.mxu0 %v1574
      %v1576 = vand.u32 %v195, 4294901760
      %1577 = vmatpush1.msra.mxu0 %v1576
      %v1578 = vand.u32 %v198, 4294901760
      %1579 = vmatprep.subr.mxu0 %v1578
      %v1580 = vand.u32 %v197, 4294901760
      %1581 = vmatpush1.msra.mxu0 %v1580
      %v1582 = vand.u32 %v200, 4294901760
      %1583 = vmatprep.subr.mxu0 %v1582
      %v1584 = vand.u32 %v199, 4294901760
      %1585 = vmatpush1.msra.mxu0 %v1584
      %v1586 = vand.u32 %v202, 4294901760
      %1587 = vmatprep.subr.mxu0 %v1586
      %v1588 = vand.u32 %v201, 4294901760
      %1589 = vmatpush1.msra.mxu0 %v1588
      %v1590 = vand.u32 %v204, 4294901760
      %1591 = vmatprep.subr.mxu0 %v1590
      %v1592 = vand.u32 %v203, 4294901760
      %1593 = vmatpush1.msra.mxu0 %v1592
      %v1594 = vand.u32 %v206, 4294901760
      %1595 = vmatprep.subr.mxu0 %v1594
      %v1596 = vand.u32 %v205, 4294901760
      %1597 = vmatpush1.msra.mxu0 %v1596
      %v1598 = vand.u32 %v208, 4294901760
      %1599 = vmatprep.subr.mxu0 %v1598
      %v1600 = vand.u32 %v207, 4294901760
      %1601 = vmatpush1.msra.mxu0 %v1600
      %v1602 = vand.u32 %v210, 4294901760
      %1603 = vmatprep.subr.mxu0 %v1602
      %v1604 = vand.u32 %v209, 4294901760
      %1605 = vmatpush1.msra.mxu0 %v1604
      %v1606 = vand.u32 %v212, 4294901760
      %1607 = vmatprep.subr.mxu0 %v1606
      %v1608 = vand.u32 %v211, 4294901760
      %1609 = vmatpush1.msra.mxu0 %v1608
      %v1610 = vand.u32 %v214, 4294901760
      %1611 = vmatprep.subr.mxu0 %v1610
      %v1612 = vand.u32 %v213, 4294901760
      %1613 = vmatpush1.msra.mxu0 %v1612
      %v1614 = vand.u32 %v216, 4294901760
      %1615 = vmatprep.subr.mxu0 %v1614
      %v1616 = vand.u32 %v215, 4294901760
      %1617 = vmatpush1.msra.mxu0 %v1616
      %v1618 = vand.u32 %v218, 4294901760
      %1619 = vmatprep.subr.mxu0 %v1618
      %v1620 = vand.u32 %v217, 4294901760
      %1621 = vmatpush1.msra.mxu0 %v1620
      %v1622 = vand.u32 %v220, 4294901760
      %1623 = vmatprep.subr.mxu0 %v1622
      %v1624 = vand.u32 %v219, 4294901760
      %1625 = vmatpush1.msra.mxu0 %v1624
      %v1626 = vand.u32 %v222, 4294901760
      %1627 = vmatprep.subr.mxu0 %v1626
      %v1628 = vand.u32 %v221, 4294901760
      %1629 = vmatpush1.msra.mxu0 %v1628
      %v1630 = vand.u32 %v224, 4294901760
      %1631 = vmatprep.subr.mxu0 %v1630
      %v1632 = vand.u32 %v223, 4294901760
      %1633 = vmatpush1.msra.mxu0 %v1632
      %v1634 = vand.u32 %v153, 4294901760
      %1635 = vmatprep.mubr.f32.mxu0 %v1634
      %v1636 = vand.u32 %v152, 4294901760
      %1637 = vmatmul.mubr.f32.gmra.mrb[0].mxu0 %v1636
      %v1638 = vpop.f32.mrb[0].mxu0
      %v1639 = vadd.f32 %v1486, %v1638
      %v1640 = vpop.f32.mrb[0].mxu0
      %v1641 = vadd.f32 %v1488, %v1640
      %v1642 = vand.u32 %v156, 4294901760
      %1643 = vmatprep.mubr.f32.mxu0 %v1642
      %v1644 = vand.u32 %v155, 4294901760
      %1645 = vmatmul.mubr.f32.gmra.mrb[0].mxu0 %v1644
      %v1646 = vpop.f32.mrb[0].mxu0
      %v1647 = vadd.f32 %v1494, %v1646
      %v1648 = vpop.f32.mrb[0].mxu0
      %v1649 = vadd.f32 %v1496, %v1648
      %v1650 = vand.u32 %v159, 4294901760
      %1651 = vmatprep.mubr.f32.mxu0 %v1650
      %v1652 = vand.u32 %v158, 4294901760
      %1653 = vmatmul.mubr.f32.gmra.mrb[0].mxu0 %v1652
      %v1654 = vpop.f32.mrb[0].mxu0
      %v1655 = vadd.f32 %v1502, %v1654
      %v1656 = vpop.f32.mrb[0].mxu0
      %v1657 = vadd.f32 %v1504, %v1656
      %1658 = vdwg.mxu0
      %v1659 = vand.u32 %v226, 4294901760
      %1660 = vmatprep.subr.mxu0 %v1659
      %v1661 = vand.u32 %v225, 4294901760
      %1662 = vmatpush1.msra.mxu0 %v1661
      %v1663 = vand.u32 %v228, 4294901760
      %1664 = vmatprep.subr.mxu0 %v1663
      %v1665 = vand.u32 %v227, 4294901760
      %1666 = vmatpush1.msra.mxu0 %v1665
      %v1667 = vand.u32 %v230, 4294901760
      %1668 = vmatprep.subr.mxu0 %v1667
      %v1669 = vand.u32 %v229, 4294901760
      %1670 = vmatpush1.msra.mxu0 %v1669
      %v1671 = vand.u32 %v232, 4294901760
      %1672 = vmatprep.subr.mxu0 %v1671
      %v1673 = vand.u32 %v231, 4294901760
      %1674 = vmatpush1.msra.mxu0 %v1673
      %v1675 = vand.u32 %v234, 4294901760
      %1676 = vmatprep.subr.mxu0 %v1675
      %v1677 = vand.u32 %v233, 4294901760
      %1678 = vmatpush1.msra.mxu0 %v1677
      %v1679 = vand.u32 %v236, 4294901760
      %1680 = vmatprep.subr.mxu0 %v1679
      %v1681 = vand.u32 %v235, 4294901760
      %1682 = vmatpush1.msra.mxu0 %v1681
      %v1683 = vand.u32 %v238, 4294901760
      %1684 = vmatprep.subr.mxu0 %v1683
      %v1685 = vand.u32 %v237, 4294901760
      %1686 = vmatpush1.msra.mxu0 %v1685
      %v1687 = vand.u32 %v240, 4294901760
      %1688 = vmatprep.subr.mxu0 %v1687
      %v1689 = vand.u32 %v239, 4294901760
      %1690 = vmatpush1.msra.mxu0 %v1689
      %1691 = vmatprep.subr.mxu0 0.0
      %1692 = vmatpush1.msra.mxu0 0.0
      %1693 = vmatprep.subr.mxu0 0.0
      %1694 = vmatpush1.msra.mxu0 0.0
      %1695 = vmatprep.subr.mxu0 0.0
      %1696 = vmatpush1.msra.mxu0 0.0
      %1697 = vmatprep.subr.mxu0 0.0
      %1698 = vmatpush1.msra.mxu0 0.0
      %1699 = vmatprep.subr.mxu0 0.0
      %1700 = vmatpush1.msra.mxu0 0.0
      %1701 = vmatprep.subr.mxu0 0.0
      %1702 = vmatpush1.msra.mxu0 0.0
      %1703 = vmatprep.subr.mxu0 0.0
      %1704 = vmatpush1.msra.mxu0 0.0
      %1705 = vmatprep.subr.mxu0 0.0
      %1706 = vmatpush1.msra.mxu0 0.0
      %1707 = vmatprep.subr.mxu0 0.0
      %1708 = vmatpush1.msra.mxu0 0.0
      %1709 = vmatprep.subr.mxu0 0.0
      %1710 = vmatpush1.msra.mxu0 0.0
      %1711 = vmatprep.subr.mxu0 0.0
      %1712 = vmatpush1.msra.mxu0 0.0
      %1713 = vmatprep.subr.mxu0 0.0
      %1714 = vmatpush1.msra.mxu0 0.0
      %1715 = vmatprep.subr.mxu0 0.0
      %1716 = vmatpush1.msra.mxu0 0.0
      %1717 = vmatprep.subr.mxu0 0.0
      %1718 = vmatpush1.msra.mxu0 0.0
      %1719 = vmatprep.subr.mxu0 0.0
      %1720 = vmatpush1.msra.mxu0 0.0
      %1721 = vmatprep.subr.mxu0 0.0
      %1722 = vmatpush1.msra.mxu0 0.0
      %1723 = vmatprep.subr.mxu0 0.0
      %1724 = vmatpush1.msra.mxu0 0.0
      %1725 = vmatprep.subr.mxu0 0.0
      %1726 = vmatpush1.msra.mxu0 0.0
      %1727 = vmatprep.subr.mxu0 0.0
      %1728 = vmatpush1.msra.mxu0 0.0
      %1729 = vmatprep.subr.mxu0 0.0
      %1730 = vmatpush1.msra.mxu0 0.0
      %1731 = vmatprep.subr.mxu0 0.0
      %1732 = vmatpush1.msra.mxu0 0.0
      %1733 = vmatprep.subr.mxu0 0.0
      %1734 = vmatpush1.msra.mxu0 0.0
      %1735 = vmatprep.subr.mxu0 0.0
      %1736 = vmatpush1.msra.mxu0 0.0
      %1737 = vmatprep.subr.mxu0 0.0
      %1738 = vmatpush1.msra.mxu0 0.0
      %1739 = vmatprep.mubr.f32.mxu0 0.0
      %v1740 = vand.u32 %v243, 4294901760
      %v1741 = vsub.f32 %v243, %v1740
      %v1742 = vand.u32 %v1741, 4294901760
      %v1743 = vsub.f32 %v1741, %v1742
      %v1744 = vand.u32 %v1743, 4294901760
      %1745 = vmatmul.mubr.f32.gmra.mrb[0].mxu0 %v1744
      %v1746 = vpop.f32.mrb[0].mxu0
      %v1747 = vadd.f32 %v1639, %v1746
      %v1748 = vpop.f32.mrb[0].mxu0
      %v1749 = vadd.f32 %v1641, %v1748
      %1750 = vmatprep.mubr.f32.mxu0 0.0
      %v1751 = vand.u32 %v246, 4294901760
      %v1752 = vsub.f32 %v246, %v1751
      %v1753 = vand.u32 %v1752, 4294901760
      %v1754 = vsub.f32 %v1752, %v1753
      %v1755 = vand.u32 %v1754, 4294901760
      %1756 = vmatmul.mubr.f32.gmra.mrb[0].mxu0 %v1755
      %v1757 = vpop.f32.mrb[0].mxu0
      %v1758 = vadd.f32 %v1647, %v1757
      %v1759 = vpop.f32.mrb[0].mxu0
      %v1760 = vadd.f32 %v1649, %v1759
      %1761 = vmatprep.mubr.f32.mxu0 0.0
      %v1762 = vand.u32 %v249, 4294901760
      %v1763 = vsub.f32 %v249, %v1762
      %v1764 = vand.u32 %v1763, 4294901760
      %v1765 = vsub.f32 %v1763, %v1764
      %v1766 = vand.u32 %v1765, 4294901760
      %1767 = vmatmul.mubr.f32.gmra.mrb[0].mxu0 %v1766
      %v1768 = vpop.f32.mrb[0].mxu0
      %v1769 = vadd.f32 %v1655, %v1768
      %v1770 = vpop.f32.mrb[0].mxu0
      %v1771 = vadd.f32 %v1657, %v1770
      %1772 = vdwg.mxu0
      %v1773 = vand.u32 %v226, 4294901760
      %v1774 = vsub.f32 %v226, %v1773
      %v1775 = vand.u32 %v1774, 4294901760
      %v1776 = vsub.f32 %v1774, %v1775
      %v1777 = vand.u32 %v1776, 4294901760
      %1778 = vmatprep.subr.mxu0 %v1777
      %v1779 = vand.u32 %v225, 4294901760
      %v1780 = vsub.f32 %v225, %v1779
      %v1781 = vand.u32 %v1780, 4294901760
      %v1782 = vsub.f32 %v1780, %v1781
      %v1783 = vand.u32 %v1782, 4294901760
      %1784 = vmatpush1.msra.mxu0 %v1783
      %v1785 = vand.u32 %v228, 4294901760
      %v1786 = vsub.f32 %v228, %v1785
      %v1787 = vand.u32 %v1786, 4294901760
      %v1788 = vsub.f32 %v1786, %v1787
      %v1789 = vand.u32 %v1788, 4294901760
      %1790 = vmatprep.subr.mxu0 %v1789
      %v1791 = vand.u32 %v227, 4294901760
      %v1792 = vsub.f32 %v227, %v1791
      %v1793 = vand.u32 %v1792, 4294901760
      %v1794 = vsub.f32 %v1792, %v1793
      %v1795 = vand.u32 %v1794, 4294901760
      %1796 = vmatpush1.msra.mxu0 %v1795
      %v1797 = vand.u32 %v230, 4294901760
      %v1798 = vsub.f32 %v230, %v1797
      %v1799 = vand.u32 %v1798, 4294901760
      %v1800 = vsub.f32 %v1798, %v1799
      %v1801 = vand.u32 %v1800, 4294901760
      %1802 = vmatprep.subr.mxu0 %v1801
      %v1803 = vand.u32 %v229, 4294901760
      %v1804 = vsub.f32 %v229, %v1803
      %v1805 = vand.u32 %v1804, 4294901760
      %v1806 = vsub.f32 %v1804, %v1805
      %v1807 = vand.u32 %v1806, 4294901760
      %1808 = vmatpush1.msra.mxu0 %v1807
      %v1809 = vand.u32 %v232, 4294901760
      %v1810 = vsub.f32 %v232, %v1809
      %v1811 = vand.u32 %v1810, 4294901760
      %v1812 = vsub.f32 %v1810, %v1811
      %v1813 = vand.u32 %v1812, 4294901760
      %1814 = vmatprep.subr.mxu0 %v1813
      %v1815 = vand.u32 %v231, 4294901760
      %v1816 = vsub.f32 %v231, %v1815
      %v1817 = vand.u32 %v1816, 4294901760
      %v1818 = vsub.f32 %v1816, %v1817
      %v1819 = vand.u32 %v1818, 4294901760
      %1820 = vmatpush1.msra.mxu0 %v1819
      %v1821 = vand.u32 %v234, 4294901760
      %v1822 = vsub.f32 %v234, %v1821
      %v1823 = vand.u32 %v1822, 4294901760
      %v1824 = vsub.f32 %v1822, %v1823
      %v1825 = vand.u32 %v1824, 4294901760
      %1826 = vmatprep.subr.mxu0 %v1825
      %v1827 = vand.u32 %v233, 4294901760
      %v1828 = vsub.f32 %v233, %v1827
      %v1829 = vand.u32 %v1828, 4294901760
      %v1830 = vsub.f32 %v1828, %v1829
      %v1831 = vand.u32 %v1830, 4294901760
      %1832 = vmatpush1.msra.mxu0 %v1831
      %v1833 = vand.u32 %v236, 4294901760
      %v1834 = vsub.f32 %v236, %v1833
      %v1835 = vand.u32 %v1834, 4294901760
      %v1836 = vsub.f32 %v1834, %v1835
      %v1837 = vand.u32 %v1836, 4294901760
      %1838 = vmatprep.subr.mxu0 %v1837
      %v1839 = vand.u32 %v235, 4294901760
      %v1840 = vsub.f32 %v235, %v1839
      %v1841 = vand.u32 %v1840, 4294901760
      %v1842 = vsub.f32 %v1840, %v1841
      %v1843 = vand.u32 %v1842, 4294901760
      %1844 = vmatpush1.msra.mxu0 %v1843
      %v1845 = vand.u32 %v238, 4294901760
      %v1846 = vsub.f32 %v238, %v1845
      %v1847 = vand.u32 %v1846, 4294901760
      %v1848 = vsub.f32 %v1846, %v1847
      %v1849 = vand.u32 %v1848, 4294901760
      %1850 = vmatprep.subr.mxu0 %v1849
      %v1851 = vand.u32 %v237, 4294901760
      %v1852 = vsub.f32 %v237, %v1851
      %v1853 = vand.u32 %v1852, 4294901760
      %v1854 = vsub.f32 %v1852, %v1853
      %v1855 = vand.u32 %v1854, 4294901760
      %1856 = vmatpush1.msra.mxu0 %v1855
      %v1857 = vand.u32 %v240, 4294901760
      %v1858 = vsub.f32 %v240, %v1857
      %v1859 = vand.u32 %v1858, 4294901760
      %v1860 = vsub.f32 %v1858, %v1859
      %v1861 = vand.u32 %v1860, 4294901760
      %1862 = vmatprep.subr.mxu0 %v1861
      %v1863 = vand.u32 %v239, 4294901760
      %v1864 = vsub.f32 %v239, %v1863
      %v1865 = vand.u32 %v1864, 4294901760
      %v1866 = vsub.f32 %v1864, %v1865
      %v1867 = vand.u32 %v1866, 4294901760
      %1868 = vmatpush1.msra.mxu0 %v1867
      %1869 = vmatprep.subr.mxu0 0.0
      %1870 = vmatpush1.msra.mxu0 0.0
      %1871 = vmatprep.subr.mxu0 0.0
      %1872 = vmatpush1.msra.mxu0 0.0
      %1873 = vmatprep.subr.mxu0 0.0
      %1874 = vmatpush1.msra.mxu0 0.0
      %1875 = vmatprep.subr.mxu0 0.0
      %1876 = vmatpush1.msra.mxu0 0.0
      %1877 = vmatprep.subr.mxu0 0.0
      %1878 = vmatpush1.msra.mxu0 0.0
      %1879 = vmatprep.subr.mxu0 0.0
      %1880 = vmatpush1.msra.mxu0 0.0
      %1881 = vmatprep.subr.mxu0 0.0
      %1882 = vmatpush1.msra.mxu0 0.0
      %1883 = vmatprep.subr.mxu0 0.0
      %1884 = vmatpush1.msra.mxu0 0.0
      %1885 = vmatprep.subr.mxu0 0.0
      %1886 = vmatpush1.msra.mxu0 0.0
      %1887 = vmatprep.subr.mxu0 0.0
      %1888 = vmatpush1.msra.mxu0 0.0
      %1889 = vmatprep.subr.mxu0 0.0
      %1890 = vmatpush1.msra.mxu0 0.0
      %1891 = vmatprep.subr.mxu0 0.0
      %1892 = vmatpush1.msra.mxu0 0.0
      %1893 = vmatprep.subr.mxu0 0.0
      %1894 = vmatpush1.msra.mxu0 0.0
      %1895 = vmatprep.subr.mxu0 0.0
      %1896 = vmatpush1.msra.mxu0 0.0
      %1897 = vmatprep.subr.mxu0 0.0
      %1898 = vmatpush1.msra.mxu0 0.0
      %1899 = vmatprep.subr.mxu0 0.0
      %1900 = vmatpush1.msra.mxu0 0.0
      %1901 = vmatprep.subr.mxu0 0.0
      %1902 = vmatpush1.msra.mxu0 0.0
      %1903 = vmatprep.subr.mxu0 0.0
      %1904 = vmatpush1.msra.mxu0 0.0
      %1905 = vmatprep.subr.mxu0 0.0
      %1906 = vmatpush1.msra.mxu0 0.0
      %1907 = vmatprep.subr.mxu0 0.0
      %1908 = vmatpush1.msra.mxu0 0.0
      %1909 = vmatprep.subr.mxu0 0.0
      %1910 = vmatpush1.msra.mxu0 0.0
      %1911 = vmatprep.subr.mxu0 0.0
      %1912 = vmatpush1.msra.mxu0 0.0
      %1913 = vmatprep.subr.mxu0 0.0
      %1914 = vmatpush1.msra.mxu0 0.0
      %1915 = vmatprep.subr.mxu0 0.0
      %1916 = vmatpush1.msra.mxu0 0.0
      %1917 = vmatprep.mubr.f32.mxu0 0.0
      %v1918 = vand.u32 %v243, 4294901760
      %1919 = vmatmul.mubr.f32.gmra.mrb[0].mxu0 %v1918
      %v1920 = vpop.f32.mrb[0].mxu0
      %v1921 = vadd.f32 %v1747, %v1920
      %v1922 = vpop.f32.mrb[0].mxu0
      %v1923 = vadd.f32 %v1749, %v1922
      %1924 = vmatprep.mubr.f32.mxu0 0.0
      %v1925 = vand.u32 %v246, 4294901760
      %1926 = vmatmul.mubr.f32.gmra.mrb[0].mxu0 %v1925
      %v1927 = vpop.f32.mrb[0].mxu0
      %v1928 = vadd.f32 %v1758, %v1927
      %v1929 = vpop.f32.mrb[0].mxu0
      %v1930 = vadd.f32 %v1760, %v1929
      %1931 = vmatprep.mubr.f32.mxu0 0.0
      %v1932 = vand.u32 %v249, 4294901760
      %1933 = vmatmul.mubr.f32.gmra.mrb[0].mxu0 %v1932
      %v1934 = vpop.f32.mrb[0].mxu0
      %v1935 = vadd.f32 %v1769, %v1934
      %v1936 = vpop.f32.mrb[0].mxu0
      %v1937 = vadd.f32 %v1771, %v1936
      %1938 = vdwg.mxu0
      %v1939 = vand.u32 %v226, 4294901760
      %v1940 = vsub.f32 %v226, %v1939
      %1941 = vmatprep.subr.mxu0 %v1940
      %v1942 = vand.u32 %v225, 4294901760
      %v1943 = vsub.f32 %v225, %v1942
      %1944 = vmatpush1.msra.mxu0 %v1943
      %v1945 = vand.u32 %v228, 4294901760
      %v1946 = vsub.f32 %v228, %v1945
      %1947 = vmatprep.subr.mxu0 %v1946
      %v1948 = vand.u32 %v227, 4294901760
      %v1949 = vsub.f32 %v227, %v1948
      %1950 = vmatpush1.msra.mxu0 %v1949
      %v1951 = vand.u32 %v230, 4294901760
      %v1952 = vsub.f32 %v230, %v1951
      %1953 = vmatprep.subr.mxu0 %v1952
      %v1954 = vand.u32 %v229, 4294901760
      %v1955 = vsub.f32 %v229, %v1954
      %1956 = vmatpush1.msra.mxu0 %v1955
      %v1957 = vand.u32 %v232, 4294901760
      %v1958 = vsub.f32 %v232, %v1957
      %1959 = vmatprep.subr.mxu0 %v1958
      %v1960 = vand.u32 %v231, 4294901760
      %v1961 = vsub.f32 %v231, %v1960
      %1962 = vmatpush1.msra.mxu0 %v1961
      %v1963 = vand.u32 %v234, 4294901760
      %v1964 = vsub.f32 %v234, %v1963
      %1965 = vmatprep.subr.mxu0 %v1964
      %v1966 = vand.u32 %v233, 4294901760
      %v1967 = vsub.f32 %v233, %v1966
      %1968 = vmatpush1.msra.mxu0 %v1967
      %v1969 = vand.u32 %v236, 4294901760
      %v1970 = vsub.f32 %v236, %v1969
      %1971 = vmatprep.subr.mxu0 %v1970
      %v1972 = vand.u32 %v235, 4294901760
      %v1973 = vsub.f32 %v235, %v1972
      %1974 = vmatpush1.msra.mxu0 %v1973
      %v1975 = vand.u32 %v238, 4294901760
      %v1976 = vsub.f32 %v238, %v1975
      %1977 = vmatprep.subr.mxu0 %v1976
      %v1978 = vand.u32 %v237, 4294901760
      %v1979 = vsub.f32 %v237, %v1978
      %1980 = vmatpush1.msra.mxu0 %v1979
      %v1981 = vand.u32 %v240, 4294901760
      %v1982 = vsub.f32 %v240, %v1981
      %1983 = vmatprep.subr.mxu0 %v1982
      %v1984 = vand.u32 %v239, 4294901760
      %v1985 = vsub.f32 %v239, %v1984
      %1986 = vmatpush1.msra.mxu0 %v1985
      %1987 = vmatprep.subr.mxu0 0.0
      %1988 = vmatpush1.msra.mxu0 0.0
      %1989 = vmatprep.subr.mxu0 0.0
      %1990 = vmatpush1.msra.mxu0 0.0
      %1991 = vmatprep.subr.mxu0 0.0
      %1992 = vmatpush1.msra.mxu0 0.0
      %1993 = vmatprep.subr.mxu0 0.0
      %1994 = vmatpush1.msra.mxu0 0.0
      %1995 = vmatprep.subr.mxu0 0.0
      %1996 = vmatpush1.msra.mxu0 0.0
      %1997 = vmatprep.subr.mxu0 0.0
      %1998 = vmatpush1.msra.mxu0 0.0
      %1999 = vmatprep.subr.mxu0 0.0
      %2000 = vmatpush1.msra.mxu0 0.0
      %2001 = vmatprep.subr.mxu0 0.0
      %2002 = vmatpush1.msra.mxu0 0.0
      %2003 = vmatprep.subr.mxu0 0.0
      %2004 = vmatpush1.msra.mxu0 0.0
      %2005 = vmatprep.subr.mxu0 0.0
      %2006 = vmatpush1.msra.mxu0 0.0
      %2007 = vmatprep.subr.mxu0 0.0
      %2008 = vmatpush1.msra.mxu0 0.0
      %2009 = vmatprep.subr.mxu0 0.0
      %2010 = vmatpush1.msra.mxu0 0.0
      %2011 = vmatprep.subr.mxu0 0.0
      %2012 = vmatpush1.msra.mxu0 0.0
      %2013 = vmatprep.subr.mxu0 0.0
      %2014 = vmatpush1.msra.mxu0 0.0
      %2015 = vmatprep.subr.mxu0 0.0
      %2016 = vmatpush1.msra.mxu0 0.0
      %2017 = vmatprep.subr.mxu0 0.0
      %2018 = vmatpush1.msra.mxu0 0.0
      %2019 = vmatprep.subr.mxu0 0.0
      %2020 = vmatpush1.msra.mxu0 0.0
      %2021 = vmatprep.subr.mxu0 0.0
      %2022 = vmatpush1.msra.mxu0 0.0
      %2023 = vmatprep.subr.mxu0 0.0
      %2024 = vmatpush1.msra.mxu0 0.0
      %2025 = vmatprep.subr.mxu0 0.0
      %2026 = vmatpush1.msra.mxu0 0.0
      %2027 = vmatprep.subr.mxu0 0.0
      %2028 = vmatpush1.msra.mxu0 0.0
      %2029 = vmatprep.subr.mxu0 0.0
      %2030 = vmatpush1.msra.mxu0 0.0
      %2031 = vmatprep.subr.mxu0 0.0
      %2032 = vmatpush1.msra.mxu0 0.0
      %2033 = vmatprep.subr.mxu0 0.0
      %2034 = vmatpush1.msra.mxu0 0.0
      %2035 = vmatprep.mubr.f32.mxu0 0.0
      %v2036 = vand.u32 %v243, 4294901760
      %v2037 = vsub.f32 %v243, %v2036
      %2038 = vmatmul.mubr.f32.gmra.mrb[0].mxu0 %v2037
      %v2039 = vpop.f32.mrb[0].mxu0
      %v2040 = vadd.f32 %v1921, %v2039
      %v2041 = vpop.f32.mrb[0].mxu0
      %v2042 = vadd.f32 %v1923, %v2041
      %2043 = vmatprep.mubr.f32.mxu0 0.0
      %v2044 = vand.u32 %v246, 4294901760
      %v2045 = vsub.f32 %v246, %v2044
      %2046 = vmatmul.mubr.f32.gmra.mrb[0].mxu0 %v2045
      %v2047 = vpop.f32.mrb[0].mxu0
      %v2048 = vadd.f32 %v1928, %v2047
      %v2049 = vpop.f32.mrb[0].mxu0
      %v2050 = vadd.f32 %v1930, %v2049
      %2051 = vmatprep.mubr.f32.mxu0 0.0
      %v2052 = vand.u32 %v249, 4294901760
      %v2053 = vsub.f32 %v249, %v2052
      %2054 = vmatmul.mubr.f32.gmra.mrb[0].mxu0 %v2053
      %v2055 = vpop.f32.mrb[0].mxu0
      %v2056 = vadd.f32 %v1935, %v2055
      %v2057 = vpop.f32.mrb[0].mxu0
      %v2058 = vadd.f32 %v1937, %v2057
      %2059 = vdwg.mxu0
      %v2060 = vand.u32 %v226, 4294901760
      %2061 = vmatprep.subr.mxu0 %v2060
      %v2062 = vand.u32 %v225, 4294901760
      %2063 = vmatpush1.msra.mxu0 %v2062
      %v2064 = vand.u32 %v228, 4294901760
      %2065 = vmatprep.subr.mxu0 %v2064
      %v2066 = vand.u32 %v227, 4294901760
      %2067 = vmatpush1.msra.mxu0 %v2066
      %v2068 = vand.u32 %v230, 4294901760
      %2069 = vmatprep.subr.mxu0 %v2068
      %v2070 = vand.u32 %v229, 4294901760
      %2071 = vmatpush1.msra.mxu0 %v2070
      %v2072 = vand.u32 %v232, 4294901760
      %2073 = vmatprep.subr.mxu0 %v2072
      %v2074 = vand.u32 %v231, 4294901760
      %2075 = vmatpush1.msra.mxu0 %v2074
      %v2076 = vand.u32 %v234, 4294901760
      %2077 = vmatprep.subr.mxu0 %v2076
      %v2078 = vand.u32 %v233, 4294901760
      %2079 = vmatpush1.msra.mxu0 %v2078
      %v2080 = vand.u32 %v236, 4294901760
      %2081 = vmatprep.subr.mxu0 %v2080
      %v2082 = vand.u32 %v235, 4294901760
      %2083 = vmatpush1.msra.mxu0 %v2082
      %v2084 = vand.u32 %v238, 4294901760
      %2085 = vmatprep.subr.mxu0 %v2084
      %v2086 = vand.u32 %v237, 4294901760
      %2087 = vmatpush1.msra.mxu0 %v2086
      %v2088 = vand.u32 %v240, 4294901760
      %2089 = vmatprep.subr.mxu0 %v2088
      %v2090 = vand.u32 %v239, 4294901760
      %2091 = vmatpush1.msra.mxu0 %v2090
      %2092 = vmatprep.subr.mxu0 0.0
      %2093 = vmatpush1.msra.mxu0 0.0
      %2094 = vmatprep.subr.mxu0 0.0
      %2095 = vmatpush1.msra.mxu0 0.0
      %2096 = vmatprep.subr.mxu0 0.0
      %2097 = vmatpush1.msra.mxu0 0.0
      %2098 = vmatprep.subr.mxu0 0.0
      %2099 = vmatpush1.msra.mxu0 0.0
      %2100 = vmatprep.subr.mxu0 0.0
      %2101 = vmatpush1.msra.mxu0 0.0
      %2102 = vmatprep.subr.mxu0 0.0
      %2103 = vmatpush1.msra.mxu0 0.0
      %2104 = vmatprep.subr.mxu0 0.0
      %2105 = vmatpush1.msra.mxu0 0.0
      %2106 = vmatprep.subr.mxu0 0.0
      %2107 = vmatpush1.msra.mxu0 0.0
      %2108 = vmatprep.subr.mxu0 0.0
      %2109 = vmatpush1.msra.mxu0 0.0
      %2110 = vmatprep.subr.mxu0 0.0
      %2111 = vmatpush1.msra.mxu0 0.0
      %2112 = vmatprep.subr.mxu0 0.0
      %2113 = vmatpush1.msra.mxu0 0.0
      %2114 = vmatprep.subr.mxu0 0.0
      %2115 = vmatpush1.msra.mxu0 0.0
      %2116 = vmatprep.subr.mxu0 0.0
      %2117 = vmatpush1.msra.mxu0 0.0
      %2118 = vmatprep.subr.mxu0 0.0
      %2119 = vmatpush1.msra.mxu0 0.0
      %2120 = vmatprep.subr.mxu0 0.0
      %2121 = vmatpush1.msra.mxu0 0.0
      %2122 = vmatprep.subr.mxu0 0.0
      %2123 = vmatpush1.msra.mxu0 0.0
      %2124 = vmatprep.subr.mxu0 0.0
      %2125 = vmatpush1.msra.mxu0 0.0
      %2126 = vmatprep.subr.mxu0 0.0
      %2127 = vmatpush1.msra.mxu0 0.0
      %2128 = vmatprep.subr.mxu0 0.0
      %2129 = vmatpush1.msra.mxu0 0.0
      %2130 = vmatprep.subr.mxu0 0.0
      %2131 = vmatpush1.msra.mxu0 0.0
      %2132 = vmatprep.subr.mxu0 0.0
      %2133 = vmatpush1.msra.mxu0 0.0
      %2134 = vmatprep.subr.mxu0 0.0
      %2135 = vmatpush1.msra.mxu0 0.0
      %2136 = vmatprep.subr.mxu0 0.0
      %2137 = vmatpush1.msra.mxu0 0.0
      %2138 = vmatprep.subr.mxu0 0.0
      %2139 = vmatpush1.msra.mxu0 0.0
      %2140 = vmatprep.mubr.f32.mxu0 0.0
      %v2141 = vand.u32 %v243, 4294901760
      %v2142 = vsub.f32 %v243, %v2141
      %v2143 = vand.u32 %v2142, 4294901760
      %2144 = vmatmul.mubr.f32.gmra.mrb[0].mxu0 %v2143
      %v2145 = vpop.f32.mrb[0].mxu0
      %v2146 = vadd.f32 %v2040, %v2145
      %v2147 = vpop.f32.mrb[0].mxu0
      %v2148 = vadd.f32 %v2042, %v2147
      %2149 = vmatprep.mubr.f32.mxu0 0.0
      %v2150 = vand.u32 %v246, 4294901760
      %v2151 = vsub.f32 %v246, %v2150
      %v2152 = vand.u32 %v2151, 4294901760
      %2153 = vmatmul.mubr.f32.gmra.mrb[0].mxu0 %v2152
      %v2154 = vpop.f32.mrb[0].mxu0
      %v2155 = vadd.f32 %v2048, %v2154
      %v2156 = vpop.f32.mrb[0].mxu0
      %v2157 = vadd.f32 %v2050, %v2156
      %2158 = vmatprep.mubr.f32.mxu0 0.0
      %v2159 = vand.u32 %v249, 4294901760
      %v2160 = vsub.f32 %v249, %v2159
      %v2161 = vand.u32 %v2160, 4294901760
      %2162 = vmatmul.mubr.f32.gmra.mrb[0].mxu0 %v2161
      %v2163 = vpop.f32.mrb[0].mxu0
      %v2164 = vadd.f32 %v2056, %v2163
      %v2165 = vpop.f32.mrb[0].mxu0
      %v2166 = vadd.f32 %v2058, %v2165
      %2167 = vdwg.mxu0
      %v2168 = vand.u32 %v226, 4294901760
      %v2169 = vsub.f32 %v226, %v2168
      %v2170 = vand.u32 %v2169, 4294901760
      %2171 = vmatprep.subr.mxu0 %v2170
      %v2172 = vand.u32 %v225, 4294901760
      %v2173 = vsub.f32 %v225, %v2172
      %v2174 = vand.u32 %v2173, 4294901760
      %2175 = vmatpush1.msra.mxu0 %v2174
      %v2176 = vand.u32 %v228, 4294901760
      %v2177 = vsub.f32 %v228, %v2176
      %v2178 = vand.u32 %v2177, 4294901760
      %2179 = vmatprep.subr.mxu0 %v2178
      %v2180 = vand.u32 %v227, 4294901760
      %v2181 = vsub.f32 %v227, %v2180
      %v2182 = vand.u32 %v2181, 4294901760
      %2183 = vmatpush1.msra.mxu0 %v2182
      %v2184 = vand.u32 %v230, 4294901760
      %v2185 = vsub.f32 %v230, %v2184
      %v2186 = vand.u32 %v2185, 4294901760
      %2187 = vmatprep.subr.mxu0 %v2186
      %v2188 = vand.u32 %v229, 4294901760
      %v2189 = vsub.f32 %v229, %v2188
      %v2190 = vand.u32 %v2189, 4294901760
      %2191 = vmatpush1.msra.mxu0 %v2190
      %v2192 = vand.u32 %v232, 4294901760
      %v2193 = vsub.f32 %v232, %v2192
      %v2194 = vand.u32 %v2193, 4294901760
      %2195 = vmatprep.subr.mxu0 %v2194
      %v2196 = vand.u32 %v231, 4294901760
      %v2197 = vsub.f32 %v231, %v2196
      %v2198 = vand.u32 %v2197, 4294901760
      %2199 = vmatpush1.msra.mxu0 %v2198
      %v2200 = vand.u32 %v234, 4294901760
      %v2201 = vsub.f32 %v234, %v2200
      %v2202 = vand.u32 %v2201, 4294901760
      %2203 = vmatprep.subr.mxu0 %v2202
      %v2204 = vand.u32 %v233, 4294901760
      %v2205 = vsub.f32 %v233, %v2204
      %v2206 = vand.u32 %v2205, 4294901760
      %2207 = vmatpush1.msra.mxu0 %v2206
      %v2208 = vand.u32 %v236, 4294901760
      %v2209 = vsub.f32 %v236, %v2208
      %v2210 = vand.u32 %v2209, 4294901760
      %2211 = vmatprep.subr.mxu0 %v2210
      %v2212 = vand.u32 %v235, 4294901760
      %v2213 = vsub.f32 %v235, %v2212
      %v2214 = vand.u32 %v2213, 4294901760
      %2215 = vmatpush1.msra.mxu0 %v2214
      %v2216 = vand.u32 %v238, 4294901760
      %v2217 = vsub.f32 %v238, %v2216
      %v2218 = vand.u32 %v2217, 4294901760
      %2219 = vmatprep.subr.mxu0 %v2218
      %v2220 = vand.u32 %v237, 4294901760
      %v2221 = vsub.f32 %v237, %v2220
      %v2222 = vand.u32 %v2221, 4294901760
      %2223 = vmatpush1.msra.mxu0 %v2222
      %v2224 = vand.u32 %v240, 4294901760
      %v2225 = vsub.f32 %v240, %v2224
      %v2226 = vand.u32 %v2225, 4294901760
      %2227 = vmatprep.subr.mxu0 %v2226
      %v2228 = vand.u32 %v239, 4294901760
      %v2229 = vsub.f32 %v239, %v2228
      %v2230 = vand.u32 %v2229, 4294901760
      %2231 = vmatpush1.msra.mxu0 %v2230
      %2232 = vmatprep.subr.mxu0 0.0
      %2233 = vmatpush1.msra.mxu0 0.0
      %2234 = vmatprep.subr.mxu0 0.0
      %2235 = vmatpush1.msra.mxu0 0.0
      %2236 = vmatprep.subr.mxu0 0.0
      %2237 = vmatpush1.msra.mxu0 0.0
      %2238 = vmatprep.subr.mxu0 0.0
      %2239 = vmatpush1.msra.mxu0 0.0
      %2240 = vmatprep.subr.mxu0 0.0
      %2241 = vmatpush1.msra.mxu0 0.0
      %2242 = vmatprep.subr.mxu0 0.0
      %2243 = vmatpush1.msra.mxu0 0.0
      %2244 = vmatprep.subr.mxu0 0.0
      %2245 = vmatpush1.msra.mxu0 0.0
      %2246 = vmatprep.subr.mxu0 0.0
      %2247 = vmatpush1.msra.mxu0 0.0
      %2248 = vmatprep.subr.mxu0 0.0
      %2249 = vmatpush1.msra.mxu0 0.0
      %2250 = vmatprep.subr.mxu0 0.0
      %2251 = vmatpush1.msra.mxu0 0.0
      %2252 = vmatprep.subr.mxu0 0.0
      %2253 = vmatpush1.msra.mxu0 0.0
      %2254 = vmatprep.subr.mxu0 0.0
      %2255 = vmatpush1.msra.mxu0 0.0
      %2256 = vmatprep.subr.mxu0 0.0
      %2257 = vmatpush1.msra.mxu0 0.0
      %2258 = vmatprep.subr.mxu0 0.0
      %2259 = vmatpush1.msra.mxu0 0.0
      %2260 = vmatprep.subr.mxu0 0.0
      %2261 = vmatpush1.msra.mxu0 0.0
      %2262 = vmatprep.subr.mxu0 0.0
      %2263 = vmatpush1.msra.mxu0 0.0
      %2264 = vmatprep.subr.mxu0 0.0
      %2265 = vmatpush1.msra.mxu0 0.0
      %2266 = vmatprep.subr.mxu0 0.0
      %2267 = vmatpush1.msra.mxu0 0.0
      %2268 = vmatprep.subr.mxu0 0.0
      %2269 = vmatpush1.msra.mxu0 0.0
      %2270 = vmatprep.subr.mxu0 0.0
      %2271 = vmatpush1.msra.mxu0 0.0
      %2272 = vmatprep.subr.mxu0 0.0
      %2273 = vmatpush1.msra.mxu0 0.0
      %2274 = vmatprep.subr.mxu0 0.0
      %2275 = vmatpush1.msra.mxu0 0.0
      %2276 = vmatprep.subr.mxu0 0.0
      %2277 = vmatpush1.msra.mxu0 0.0
      %2278 = vmatprep.subr.mxu0 0.0
      %2279 = vmatpush1.msra.mxu0 0.0
      %2280 = vmatprep.mubr.f32.mxu0 0.0
      %v2281 = vand.u32 %v243, 4294901760
      %2282 = vmatmul.mubr.f32.gmra.mrb[0].mxu0 %v2281
      %v2283 = vpop.f32.mrb[0].mxu0
      %v2284 = vadd.f32 %v2146, %v2283
      %v2285 = vpop.f32.mrb[0].mxu0
      %v2286 = vadd.f32 %v2148, %v2285
      %2287 = vmatprep.mubr.f32.mxu0 0.0
      %v2288 = vand.u32 %v246, 4294901760
      %2289 = vmatmul.mubr.f32.gmra.mrb[0].mxu0 %v2288
      %v2290 = vpop.f32.mrb[0].mxu0
      %v2291 = vadd.f32 %v2155, %v2290
      %v2292 = vpop.f32.mrb[0].mxu0
      %v2293 = vadd.f32 %v2157, %v2292
      %2294 = vmatprep.mubr.f32.mxu0 0.0
      %v2295 = vand.u32 %v249, 4294901760
      %2296 = vmatmul.mubr.f32.gmra.mrb[0].mxu0 %v2295
      %v2297 = vpop.f32.mrb[0].mxu0
      %v2298 = vadd.f32 %v2164, %v2297
      %v2299 = vpop.f32.mrb[0].mxu0
      %v2300 = vadd.f32 %v2166, %v2299
      %2301 = vdwg.mxu0
      %v2302 = vand.u32 %v226, 4294901760
      %2303 = vmatprep.subr.mxu0 %v2302
      %v2304 = vand.u32 %v225, 4294901760
      %2305 = vmatpush1.msra.mxu0 %v2304
      %v2306 = vand.u32 %v228, 4294901760
      %2307 = vmatprep.subr.mxu0 %v2306
      %v2308 = vand.u32 %v227, 4294901760
      %2309 = vmatpush1.msra.mxu0 %v2308
      %v2310 = vand.u32 %v230, 4294901760
      %2311 = vmatprep.subr.mxu0 %v2310
      %v2312 = vand.u32 %v229, 4294901760
      %2313 = vmatpush1.msra.mxu0 %v2312
      %v2314 = vand.u32 %v232, 4294901760
      %2315 = vmatprep.subr.mxu0 %v2314
      %v2316 = vand.u32 %v231, 4294901760
      %2317 = vmatpush1.msra.mxu0 %v2316
      %v2318 = vand.u32 %v234, 4294901760
      %2319 = vmatprep.subr.mxu0 %v2318
      %v2320 = vand.u32 %v233, 4294901760
      %2321 = vmatpush1.msra.mxu0 %v2320
      %v2322 = vand.u32 %v236, 4294901760
      %2323 = vmatprep.subr.mxu0 %v2322
      %v2324 = vand.u32 %v235, 4294901760
      %2325 = vmatpush1.msra.mxu0 %v2324
      %v2326 = vand.u32 %v238, 4294901760
      %2327 = vmatprep.subr.mxu0 %v2326
      %v2328 = vand.u32 %v237, 4294901760
      %2329 = vmatpush1.msra.mxu0 %v2328
      %v2330 = vand.u32 %v240, 4294901760
      %2331 = vmatprep.subr.mxu0 %v2330
      %v2332 = vand.u32 %v239, 4294901760
      %2333 = vmatpush1.msra.mxu0 %v2332
      %2334 = vmatprep.subr.mxu0 0.0
      %2335 = vmatpush1.msra.mxu0 0.0
      %2336 = vmatprep.subr.mxu0 0.0
      %2337 = vmatpush1.msra.mxu0 0.0
      %2338 = vmatprep.subr.mxu0 0.0
      %2339 = vmatpush1.msra.mxu0 0.0
      %2340 = vmatprep.subr.mxu0 0.0
      %2341 = vmatpush1.msra.mxu0 0.0
      %2342 = vmatprep.subr.mxu0 0.0
      %2343 = vmatpush1.msra.mxu0 0.0
      %2344 = vmatprep.subr.mxu0 0.0
      %2345 = vmatpush1.msra.mxu0 0.0
      %2346 = vmatprep.subr.mxu0 0.0
      %2347 = vmatpush1.msra.mxu0 0.0
      %2348 = vmatprep.subr.mxu0 0.0
      %2349 = vmatpush1.msra.mxu0 0.0
      %2350 = vmatprep.subr.mxu0 0.0
      %2351 = vmatpush1.msra.mxu0 0.0
      %2352 = vmatprep.subr.mxu0 0.0
      %2353 = vmatpush1.msra.mxu0 0.0
      %2354 = vmatprep.subr.mxu0 0.0
      %2355 = vmatpush1.msra.mxu0 0.0
      %2356 = vmatprep.subr.mxu0 0.0
      %2357 = vmatpush1.msra.mxu0 0.0
      %2358 = vmatprep.subr.mxu0 0.0
      %2359 = vmatpush1.msra.mxu0 0.0
      %2360 = vmatprep.subr.mxu0 0.0
      %2361 = vmatpush1.msra.mxu0 0.0
      %2362 = vmatprep.subr.mxu0 0.0
      %2363 = vmatpush1.msra.mxu0 0.0
      %2364 = vmatprep.subr.mxu0 0.0
      %2365 = vmatpush1.msra.mxu0 0.0
      %2366 = vmatprep.subr.mxu0 0.0
      %2367 = vmatpush1.msra.mxu0 0.0
      %2368 = vmatprep.subr.mxu0 0.0
      %2369 = vmatpush1.msra.mxu0 0.0
      %2370 = vmatprep.subr.mxu0 0.0
      %2371 = vmatpush1.msra.mxu0 0.0
      %2372 = vmatprep.subr.mxu0 0.0
      %2373 = vmatpush1.msra.mxu0 0.0
      %2374 = vmatprep.subr.mxu0 0.0
      %2375 = vmatpush1.msra.mxu0 0.0
      %2376 = vmatprep.subr.mxu0 0.0
      %2377 = vmatpush1.msra.mxu0 0.0
      %2378 = vmatprep.subr.mxu0 0.0
      %2379 = vmatpush1.msra.mxu0 0.0
      %2380 = vmatprep.subr.mxu0 0.0
      %2381 = vmatpush1.msra.mxu0 0.0
      %2382 = vmatprep.mubr.f32.mxu0 0.0
      %v2383 = vand.u32 %v243, 4294901760
      %2384 = vmatmul.mubr.f32.gmra.mrb[0].mxu0 %v2383
      %v2385 = vpop.f32.mrb[0].mxu0
      %v2386 = vadd.f32 %v2284, %v2385
      %v2387 = vpop.f32.mrb[0].mxu0
      %v2388 = vadd.f32 %v2286, %v2387
      %2389 = vmatprep.mubr.f32.mxu0 0.0
      %v2390 = vand.u32 %v246, 4294901760
      %2391 = vmatmul.mubr.f32.gmra.mrb[0].mxu0 %v2390
      %v2392 = vpop.f32.mrb[0].mxu0
      %v2393 = vadd.f32 %v2291, %v2392
      %v2394 = vpop.f32.mrb[0].mxu0
      %v2395 = vadd.f32 %v2293, %v2394
      %2396 = vmatprep.mubr.f32.mxu0 0.0
      %v2397 = vand.u32 %v249, 4294901760
      %2398 = vmatmul.mubr.f32.gmra.mrb[0].mxu0 %v2397
      %v2399 = vpop.f32.mrb[0].mxu0
      %v2400 = vadd.f32 %v2298, %v2399
      %v2401 = vpop.f32.mrb[0].mxu0
      %v2402 = vadd.f32 %v2300, %v2401
      %2403 = vdwg.mxu0
      %2404 = vst [vmem:[%s150] sm:$0xff] %v2386
      %vm2405 = vcmask 130048
      %2406 = vst.msk [vmem:[%s150 + $0x8] sm:$0xff] %vm2405, %v2388
      %2407 = vst [vmem:[%s150 + $0x10] sm:$0xff] %v2393
      %2408 = vst.msk [vmem:[%s150 + $0x18] sm:$0xff] %vm2405, %v2395
      %2409 = vst [vmem:[%s150 + $0x20] sm:$0xff] %v2400
      %2410 = vst.msk [vmem:[%s150 + $0x28] sm:$0xff] %vm2405, %v2402
      %s2411 = smul.u32 3, %s13
      %p2412 = scmp.lt.s32.totalorder %s2411, 5
      %s2413 = scalar_select %p2412, %s2411, 5
      %s2414 = smul.addr %s2413, 2
      %s2415 = smul.addr %s2414, 8
      %s2416 = scalar_lea.vmem %s2, %s2415
      // Predicated region
      $region29: #{_csi_kernel.1} parent=27 // pred_check
        %p2417 = pneg %p78
      $region30: #{_csi_kernel.1} parent=27 // pred_check_branch
        %2419 = sbr.rel (%p2417) target = $region32
      $region31: #{_csi_kernel.1} parent=27 // pred_region
        %s2420 = smul.u32 3, %s13
      $region32: #{_csi_kernel.1} parent=27 // pred_fallthru
        _
    $region28: #{_csi_kernel.1} parent=5 // pred_fallthru
      _
    %p2421 = scmp.le.s32.totalorder 2, %s8
    // Predicated region
    $region33: #{_csi_kernel.1} parent=5 // pred_check
      %p2422 = pneg %p2421
    $region34: #{_csi_kernel.1} parent=5 // pred_check_branch
      %2424 = sbr.rel (%p2422) target = $region36
    $region35: #{_csi_kernel.1} parent=5 // pred_region
      %s2425 = ssub.s32 %s8, 2
      // Predicated region
      $region37: #{_csi_kernel.1} parent=35 // pred_check
        %p2426 = pneg %p84
      $region38: #{_csi_kernel.1} parent=35 // pred_check_branch
        %2428 = sbr.rel (%p2426) target = $region40
      $region39: #{_csi_kernel.1} parent=35 // pred_region
        %s2429 = smul.u32 3, %s14
        %p2430 = scmp.lt.s32.totalorder %s2429, 5
        %s2431 = scalar_select %p2430, %s2429, 5
        %s2432 = smul.addr %s2431, 2
        %s2433 = smul.addr %s2432, 8
        %s2434 = scalar_lea.vmem %s2, %s2433
      $region40: #{_csi_kernel.1} parent=35 // pred_fallthru
        _
    $region36: #{_csi_kernel.1} parent=5 // pred_fallthru
      _
  $region6: #{_csi_kernel.1} parent=0 // loop_footer
    %s12 = sadd.s32 1, %s8
  $region7: #{_csi_kernel.1} parent=0 // loop_footer_branch
    %7 = sbr.rel target = $region3
  $region8: #{_csi_kernel.1} parent=0 // loop_exit
    _

// kernel: custom-call.4
$region0: #{custom-call.4}
  %s0 = inlined_call_operand.vmem [shape: f32[4,12,9,8], index: 0, kind: input, shape index: {}]
  %s1 = inlined_call_operand.vmem [shape: f32[4,12,9,8], index: 1, kind: input, shape index: {}]
  %s2 = inlined_call_operand.vmem [shape: c64[4,12,9,8], index: 2, kind: output, shape index: {}]
  %s4 = scalar_lea.vmem %s2, 288
  %v5 = vld [vmem:[%s0] sm:$0xff]
  %6 = vst [vmem:[%s2] sm:$0xff] %v5
  %s7 = scalar_lea.vmem %s2, 8
  %s8 = scalar_lea.vmem %s0, 8
  %v9 = vld [vmem:[%s8] sm:$0xff]
  %10 = vst [vmem:[%s7] sm:$0xff] %v9
  %s11 = scalar_lea.vmem %s2, 16
  %s12 = scalar_lea.vmem %s0, 16
  %v13 = vld [vmem:[%s12] sm:$0xff]
  %14 = vst [vmem:[%s11] sm:$0xff] %v13
  %s15 = scalar_lea.vmem %s2, 24
  %s16 = scalar_lea.vmem %s0, 24
  %v17 = vld [vmem:[%s16] sm:$0xff]
  %18 = vst [vmem:[%s15] sm:$0xff] %v17
  %s19 = scalar_lea.vmem %s2, 32
  %s20 = scalar_lea.vmem %s0, 32
  %v21 = vld [vmem:[%s20] sm:$0xff]
  %22 = vst [vmem:[%s19] sm:$0xff] %v21
  %s23 = scalar_lea.vmem %s2, 40
  %s24 = scalar_lea.vmem %s0, 40
  %v25 = vld [vmem:[%s24] sm:$0xff]
  %26 = vst [vmem:[%s23] sm:$0xff] %v25
  %s27 = scalar_lea.vmem %s2, 48
  %s28 = scalar_lea.vmem %s0, 48
  %v29 = vld [vmem:[%s28] sm:$0xff]
  %30 = vst [vmem:[%s27] sm:$0xff] %v29
  %s31 = scalar_lea.vmem %s2, 56
  %s32 = scalar_lea.vmem %s0, 56
  %v33 = vld [vmem:[%s32] sm:$0xff]
  %34 = vst [vmem:[%s31] sm:$0xff] %v33
  %s35 = scalar_lea.vmem %s2, 64
  %s36 = scalar_lea.vmem %s0, 64
  %v37 = vld [vmem:[%s36] sm:$0xff]
  %38 = vst [vmem:[%s35] sm:$0xff] %v37
  %s39 = scalar_lea.vmem %s2, 72
  %s40 = scalar_lea.vmem %s0, 72
  %v41 = vld [vmem:[%s40] sm:$0xff]
  %42 = vst [vmem:[%s39] sm:$0xff] %v41
  %s43 = scalar_lea.vmem %s2, 80
  %s44 = scalar_lea.vmem %s0, 80
  %v45 = vld [vmem:[%s44] sm:$0xff]
  %46 = vst [vmem:[%s43] sm:$0xff] %v45
  %s47 = scalar_lea.vmem %s2, 88
  %s48 = scalar_lea.vmem %s0, 88
  %v49 = vld [vmem:[%s48] sm:$0xff]
  %50 = vst [vmem:[%s47] sm:$0xff] %v49
  %s51 = scalar_lea.vmem %s2, 96
  %s52 = scalar_lea.vmem %s0, 96
  %v53 = vld [vmem:[%s52] sm:$0xff]
  %54 = vst [vmem:[%s51] sm:$0xff] %v53
  %s55 = scalar_lea.vmem %s2, 104
  %s56 = scalar_lea.vmem %s0, 104
  %v57 = vld [vmem:[%s56] sm:$0xff]
  %58 = vst [vmem:[%s55] sm:$0xff] %v57
  %s59 = scalar_lea.vmem %s2, 112
  %s60 = scalar_lea.vmem %s0, 112
  %v61 = vld [vmem:[%s60] sm:$0xff]
  %62 = vst [vmem:[%s59] sm:$0xff] %v61
  %s63 = scalar_lea.vmem %s2, 120
  %s64 = scalar_lea.vmem %s0, 120
  %v65 = vld [vmem:[%s64] sm:$0xff]
  %66 = vst [vmem:[%s63] sm:$0xff] %v65
  %s67 = scalar_lea.vmem %s2, 128
  %s68 = scalar_lea.vmem %s0, 128
  %v69 = vld [vmem:[%s68] sm:$0xff]
  %70 = vst [vmem:[%s67] sm:$0xff] %v69
  %s71 = scalar_lea.vmem %s2, 136
  %s72 = scalar_lea.vmem %s0, 136
  %v73 = vld [vmem:[%s72] sm:$0xff]
  %74 = vst [vmem:[%s71] sm:$0xff] %v73
  %s75 = scalar_lea.vmem %s2, 144
  %s76 = scalar_lea.vmem %s0, 144
  %v77 = vld [vmem:[%s76] sm:$0xff]
  %78 = vst [vmem:[%s75] sm:$0xff] %v77
  %s79 = scalar_lea.vmem %s2, 152
  %s80 = scalar_lea.vmem %s0, 152
  %v81 = vld [vmem:[%s80] sm:$0xff]
  %82 = vst [vmem:[%s79] sm:$0xff] %v81
  %s83 = scalar_lea.vmem %s2, 160
  %s84 = scalar_lea.vmem %s0, 160
  %v85 = vld [vmem:[%s84] sm:$0xff]
  %86 = vst [vmem:[%s83] sm:$0xff] %v85
  %s87 = scalar_lea.vmem %s2, 168
  %s88 = scalar_lea.vmem %s0, 168
  %v89 = vld [vmem:[%s88] sm:$0xff]
  %90 = vst [vmem:[%s87] sm:$0xff] %v89
  %s91 = scalar_lea.vmem %s2, 176
  %s92 = scalar_lea.vmem %s0, 176
  %v93 = vld [vmem:[%s92] sm:$0xff]
  %94 = vst [vmem:[%s91] sm:$0xff] %v93
  %s95 = scalar_lea.vmem %s2, 184
  %s96 = scalar_lea.vmem %s0, 184
  %v97 = vld [vmem:[%s96] sm:$0xff]
  %98 = vst [vmem:[%s95] sm:$0xff] %v97
  %s99 = scalar_lea.vmem %s2, 192
  %s100 = scalar_lea.vmem %s0, 192
  %v101 = vld [vmem:[%s100] sm:$0xff]
  %102 = vst [vmem:[%s99] sm:$0xff] %v101
  %s103 = scalar_lea.vmem %s2, 200
  %s104 = scalar_lea.vmem %s0, 200
  %v105 = vld [vmem:[%s104] sm:$0xff]
  %106 = vst [vmem:[%s103] sm:$0xff] %v105
  %s107 = scalar_lea.vmem %s2, 208
  %s108 = scalar_lea.vmem %s0, 208
  %v109 = vld [vmem:[%s108] sm:$0xff]
  %110 = vst [vmem:[%s107] sm:$0xff] %v109
  %s111 = scalar_lea.vmem %s2, 216
  %s112 = scalar_lea.vmem %s0, 216
  %v113 = vld [vmem:[%s112] sm:$0xff]
  %114 = vst [vmem:[%s111] sm:$0xff] %v113
  %s115 = scalar_lea.vmem %s2, 224
  %s116 = scalar_lea.vmem %s0, 224
  %v117 = vld [vmem:[%s116] sm:$0xff]
  %118 = vst [vmem:[%s115] sm:$0xff] %v117
  %s119 = scalar_lea.vmem %s2, 232
  %s120 = scalar_lea.vmem %s0, 232
  %v121 = vld [vmem:[%s120] sm:$0xff]
  %122 = vst [vmem:[%s119] sm:$0xff] %v121
  %s123 = scalar_lea.vmem %s2, 240
  %s124 = scalar_lea.vmem %s0, 240
  %v125 = vld [vmem:[%s124] sm:$0xff]
  %126 = vst [vmem:[%s123] sm:$0xff] %v125
  %s127 = scalar_lea.vmem %s2, 248
  %s128 = scalar_lea.vmem %s0, 248
  %v129 = vld [vmem:[%s128] sm:$0xff]
  %130 = vst [vmem:[%s127] sm:$0xff] %v129
  %s131 = scalar_lea.vmem %s2, 256
  %s132 = scalar_lea.vmem %s0, 256
  %v133 = vld [vmem:[%s132] sm:$0xff]
  %134 = vst [vmem:[%s131] sm:$0xff] %v133
  %s135 = scalar_lea.vmem %s2, 264
  %s136 = scalar_lea.vmem %s0, 264
  %v137 = vld [vmem:[%s136] sm:$0xff]
  %138 = vst [vmem:[%s135] sm:$0xff] %v137
  %s139 = scalar_lea.vmem %s2, 272
  %s140 = scalar_lea.vmem %s0, 272
  %v141 = vld [vmem:[%s140] sm:$0xff]
  %142 = vst [vmem:[%s139] sm:$0xff] %v141
  %s143 = scalar_lea.vmem %s2, 280
  %s144 = scalar_lea.vmem %s0, 280
  %v145 = vld [vmem:[%s144] sm:$0xff]
  %146 = vst [vmem:[%s143] sm:$0xff] %v145
  %v147 = vld [vmem:[%s1] sm:$0xff]
  %148 = vst [vmem:[%s4] sm:$0xff] %v147
  %s149 = scalar_lea.vmem %s4, 8
  %s150 = scalar_lea.vmem %s1, 8
  %v151 = vld [vmem:[%s150] sm:$0xff]
  %152 = vst [vmem:[%s149] sm:$0xff] %v151
  %s153 = scalar_lea.vmem %s4, 16
  %s154 = scalar_lea.vmem %s1, 16
  %v155 = vld [vmem:[%s154] sm:$0xff]
  %156 = vst [vmem:[%s153] sm:$0xff] %v155
  %s157 = scalar_lea.vmem %s4, 24
  %s158 = scalar_lea.vmem %s1, 24
  %v159 = vld [vmem:[%s158] sm:$0xff]
  %160 = vst [vmem:[%s157] sm:$0xff] %v159
  %s161 = scalar_lea.vmem %s4, 32
  %s162 = scalar_lea.vmem %s1, 32
  %v163 = vld [vmem:[%s162] sm:$0xff]
  %164 = vst [vmem:[%s161] sm:$0xff] %v163
  %s165 = scalar_lea.vmem %s4, 40
  %s166 = scalar_lea.vmem %s1, 40
  %v167 = vld [vmem:[%s166] sm:$0xff]
  %168 = vst [vmem:[%s165] sm:$0xff] %v167
  %s169 = scalar_lea.vmem %s4, 48
  %s170 = scalar_lea.vmem %s1, 48
  %v171 = vld [vmem:[%s170] sm:$0xff]
  %172 = vst [vmem:[%s169] sm:$0xff] %v171
  %s173 = scalar_lea.vmem %s4, 56
  %s174 = scalar_lea.vmem %s1, 56
  %v175 = vld [vmem:[%s174] sm:$0xff]
  %176 = vst [vmem:[%s173] sm:$0xff] %v175
  %s177 = scalar_lea.vmem %s4, 64
  %s178 = scalar_lea.vmem %s1, 64
  %v179 = vld [vmem:[%s178] sm:$0xff]
  %180 = vst [vmem:[%s177] sm:$0xff] %v179
  %s181 = scalar_lea.vmem %s4, 72
  %s182 = scalar_lea.vmem %s1, 72
  %v183 = vld [vmem:[%s182] sm:$0xff]
  %184 = vst [vmem:[%s181] sm:$0xff] %v183
  %s185 = scalar_lea.vmem %s4, 80
  %s186 = scalar_lea.vmem %s1, 80
  %v187 = vld [vmem:[%s186] sm:$0xff]
  %188 = vst [vmem:[%s185] sm:$0xff] %v187
  %s189 = scalar_lea.vmem %s4, 88
  %s190 = scalar_lea.vmem %s1, 88
  %v191 = vld [vmem:[%s190] sm:$0xff]
  %192 = vst [vmem:[%s189] sm:$0xff] %v191
  %s193 = scalar_lea.vmem %s4, 96
  %s194 = scalar_lea.vmem %s1, 96
  %v195 = vld [vmem:[%s194] sm:$0xff]
  %196 = vst [vmem:[%s193] sm:$0xff] %v195
  %s197 = scalar_lea.vmem %s4, 104
  %s198 = scalar_lea.vmem %s1, 104
  %v199 = vld [vmem:[%s198] sm:$0xff]
  %200 = vst [vmem:[%s197] sm:$0xff] %v199
  %s201 = scalar_lea.vmem %s4, 112
  %s202 = scalar_lea.vmem %s1, 112
  %v203 = vld [vmem:[%s202] sm:$0xff]
  %204 = vst [vmem:[%s201] sm:$0xff] %v203
  %s205 = scalar_lea.vmem %s4, 120
  %s206 = scalar_lea.vmem %s1, 120
  %v207 = vld [vmem:[%s206] sm:$0xff]
  %208 = vst [vmem:[%s205] sm:$0xff] %v207
  %s209 = scalar_lea.vmem %s4, 128
  %s210 = scalar_lea.vmem %s1, 128
  %v211 = vld [vmem:[%s210] sm:$0xff]
  %212 = vst [vmem:[%s209] sm:$0xff] %v211
  %s213 = scalar_lea.vmem %s4, 136
  %s214 = scalar_lea.vmem %s1, 136
  %v215 = vld [vmem:[%s214] sm:$0xff]
  %216 = vst [vmem:[%s213] sm:$0xff] %v215
  %s217 = scalar_lea.vmem %s4, 144
  %s218 = scalar_lea.vmem %s1, 144
  %v219 = vld [vmem:[%s218] sm:$0xff]
  %220 = vst [vmem:[%s217] sm:$0xff] %v219
  %s221 = scalar_lea.vmem %s4, 152
  %s222 = scalar_lea.vmem %s1, 152
  %v223 = vld [vmem:[%s222] sm:$0xff]
  %224 = vst [vmem:[%s221] sm:$0xff] %v223
  %s225 = scalar_lea.vmem %s4, 160
  %s226 = scalar_lea.vmem %s1, 160
  %v227 = vld [vmem:[%s226] sm:$0xff]
  %228 = vst [vmem:[%s225] sm:$0xff] %v227
  %s229 = scalar_lea.vmem %s4, 168
  %s230 = scalar_lea.vmem %s1, 168
  %v231 = vld [vmem:[%s230] sm:$0xff]
  %232 = vst [vmem:[%s229] sm:$0xff] %v231
  %s233 = scalar_lea.vmem %s4, 176
  %s234 = scalar_lea.vmem %s1, 176
  %v235 = vld [vmem:[%s234] sm:$0xff]
  %236 = vst [vmem:[%s233] sm:$0xff] %v235
  %s237 = scalar_lea.vmem %s4, 184
  %s238 = scalar_lea.vmem %s1, 184
  %v239 = vld [vmem:[%s238] sm:$0xff]
  %240 = vst [vmem:[%s237] sm:$0xff] %v239
  %s241 = scalar_lea.vmem %s4, 192
  %s242 = scalar_lea.vmem %s1, 192
  %v243 = vld [vmem:[%s242] sm:$0xff]
  %244 = vst [vmem:[%s241] sm:$0xff] %v243
  %s245 = scalar_lea.vmem %s4, 200
  %s246 = scalar_lea.vmem %s1, 200
  %v247 = vld [vmem:[%s246] sm:$0xff]
  %248 = vst [vmem:[%s245] sm:$0xff] %v247
  %s249 = scalar_lea.vmem %s4, 208
  %s250 = scalar_lea.vmem %s1, 208
  %v251 = vld [vmem:[%s250] sm:$0xff]
  %252 = vst [vmem:[%s249] sm:$0xff] %v251
  %s253 = scalar_lea.vmem %s4, 216
  %s254 = scalar_lea.vmem %s1, 216
  %v255 = vld [vmem:[%s254] sm:$0xff]
  %256 = vst [vmem:[%s253] sm:$0xff] %v255
  %s257 = scalar_lea.vmem %s4, 224
  %s258 = scalar_lea.vmem %s1, 224
  %v259 = vld [vmem:[%s258] sm:$0xff]
  %260 = vst [vmem:[%s257] sm:$0xff] %v259
  %s261 = scalar_lea.vmem %s4, 232
  %s262 = scalar_lea.vmem %s1, 232
  %v263 = vld [vmem:[%s262] sm:$0xff]
  %264 = vst [vmem:[%s261] sm:$0xff] %v263
  %s265 = scalar_lea.vmem %s4, 240
  %s266 = scalar_lea.vmem %s1, 240
  %v267 = vld [vmem:[%s266] sm:$0xff]
  %268 = vst [vmem:[%s265] sm:$0xff] %v267
  %s269 = scalar_lea.vmem %s4, 248
  %s270 = scalar_lea.vmem %s1, 248
  %v271 = vld [vmem:[%s270] sm:$0xff]
  %272 = vst [vmem:[%s269] sm:$0xff] %v271
  %s273 = scalar_lea.vmem %s4, 256
  %s274 = scalar_lea.vmem %s1, 256
  %v275 = vld [vmem:[%s274] sm:$0xff]
  %276 = vst [vmem:[%s273] sm:$0xff] %v275
  %s277 = scalar_lea.vmem %s4, 264
  %s278 = scalar_lea.vmem %s1, 264
  %v279 = vld [vmem:[%s278] sm:$0xff]
  %280 = vst [vmem:[%s277] sm:$0xff] %v279
  %s281 = scalar_lea.vmem %s4, 272
  %s282 = scalar_lea.vmem %s1, 272
  %v283 = vld [vmem:[%s282] sm:$0xff]
  %284 = vst [vmem:[%s281] sm:$0xff] %v283
  %s285 = scalar_lea.vmem %s4, 280
  %s286 = scalar_lea.vmem %s1, 280
  %v287 = vld [vmem:[%s286] sm:$0xff]
  %288 = vst [vmem:[%s285] sm:$0xff] %v287

</llo_original>
